<compile_context>
chip_gen: v5e
topology: v5e:2x2
jax: 0.10.0
libtpu: 0.0.40
codegen_flags: <defaults>
</compile_context>

<pallas_src>
import jax
import jax.numpy as jnp
from jax.experimental import pallas as pl
from jax.experimental.pallas import tpu as pltpu


# ------------------------------ Pallas kernel ------------------------------ #

def _fused_audio_cnn_kernel(x_ref,
                            w0_ref, s0_ref, b0_ref,
                            w1_ref, s1_ref, b1_ref,
                            w2_ref, s2_ref, b2_ref,
                            w3_ref, s3_ref, b3_ref,
                            pool_ref, fcw_ref, fcb_ref,
                            o_ref):
    """Fused AudioCNNPool forward (4 conv blocks + classifier), one kernel.

    x_ref:    (B*T, Cin)   f32   channels-last input, batch flattened into rows
                                 (batch b occupies rows [b*T, (b+1)*T))
    wN_ref:   (3, Cin, Cout) bf16  per-tap conv weights of block N
    sN_ref:   (1, Cout)    f32   folded BN scale = gamma / sqrt(var + eps)
    bN_ref:   (1, Cout)    f32   folded BN shift = beta + (conv_bias - mean)*scale
    pool_ref: (B, B*T-12)  bf16  masked time-mean matrix (1/valid_len on valid rows)
    fcw_ref:  (C, 128)     bf16  classifier weight, zero-padded to 128 lanes
    fcb_ref:  (1, 128)     f32   classifier bias, zero-padded to 128 lanes
    o_ref:    (B, 128)     f32   lane-dense logits (first num_classes lanes valid)
    """
    blocks = ((w0_ref, s0_ref, b0_ref),
              (w1_ref, s1_ref, b1_ref),
              (w2_ref, s2_ref, b2_ref),
              (w3_ref, s3_ref, b3_ref))

    h = x_ref[...]                                    # (N, Cin) f32
    for w_ref, sc_ref, sh_ref in blocks:              # 4 blocks, static unroll
        nc = h.shape[0] - 2                           # 'valid' conv output rows
        # Conv1d(kernel=3, padding='valid') as 3 accumulating per-tap matmuls
        # on the MXU (bf16 operands, f32 accumulation); batch folded into rows.
        y = jnp.dot(h[0:nc, :].astype(jnp.bfloat16), w_ref[0],
                    preferred_element_type=jnp.float32)
        y += jnp.dot(h[1:nc + 1, :].astype(jnp.bfloat16), w_ref[1],
                     preferred_element_type=jnp.float32)
        y += jnp.dot(h[2:nc + 2, :].astype(jnp.bfloat16), w_ref[2],
                     preferred_element_type=jnp.float32)
        # Fused conv-bias + BatchNorm1d (eval) affine + ReLU, f32 on the VPU.
        y = jnp.maximum(y * sc_ref[...] + sh_ref[...], 0.0)
        # MaxPool1d(kernel_size=2, stride=1).
        h = jnp.maximum(y[:-1, :], y[1:, :])          # (nc - 1, Cout)

    # Classifier tail, fully batched:
    #   masked time-mean = pool_mat @ h   (1/valid_len folded into pool_mat)
    #   logits           = mean @ fc_w_padded + fc_b_padded  (lane-dense store)
    mean = jnp.dot(pool_ref[...], h.astype(jnp.bfloat16),
                   preferred_element_type=jnp.float32)          # (B, C) f32
    o_ref[...] = (jnp.dot(mean.astype(jnp.bfloat16), fcw_ref[...],
                          preferred_element_type=jnp.float32)
                  + fcb_ref[...])                               # (B, 128) f32


# --------------------------------- Wrapper ---------------------------------- #

@jax.jit
def audio_cnn_pool_forward(x_ncw, params):
    """AudioCNNPool forward. x_ncw: (B, 10, T) in PyTorch NCW layout."""
    B, Cin, T = x_ncw.shape
    num_blocks = len(params["blocks"])
    valid_len = T - 3 * num_blocks
    assert valid_len >= 1, "input too short for 4 conv blocks"
    C_last, num_classes = params["fc_w"].shape
    n0 = B * T
    n_final = n0 - 3 * num_blocks

    # Channels-last + flatten batch into the row (sublane / MXU-M) axis.
    # Tiny boundary op; fused into this jit, everything else is in-kernel.
    x2d = jnp.transpose(x_ncw, (0, 2, 1)).astype(jnp.float32).reshape(n0, Cin)

    # Per-block args: per-tap conv weights (bf16 for the MXU) + folded BN affine (f32).
    args = [x2d]
    for p in params["blocks"]:
        cout = p["w"].shape[2]
        args += [p["w"].astype(jnp.bfloat16),
                 p["scale"].reshape(1, cout).astype(jnp.float32),
                 p["shift"].reshape(1, cout).astype(jnp.float32)]

    # Batched masked time-mean matrix: pool_mat[b, r] = 1/valid_len iff global
    # row r is a valid (non-garbage, non-cross-batch) time step of batch b.
    rows = jnp.arange(n_final)[None, :]
    starts = (jnp.arange(B) * T)[:, None]
    pool_mat = (((rows >= starts) & (rows < starts + valid_len))
                .astype(jnp.float32) / valid_len).astype(jnp.bfloat16)

    # Lane-dense classifier: zero-pad num_classes out to 128 lanes (unmasked store).
    fcw_pad = (jnp.zeros((C_last, 128), jnp.float32)
               .at[:, :num_classes].set(params["fc_w"]).astype(jnp.bfloat16))
    fcb_pad = jnp.zeros((1, 128), jnp.float32).at[0, :num_classes].set(params["fc_b"])
    args += [pool_mat, fcw_pad, fcb_pad]

    # Advisory cost estimate (3 per-tap conv matmuls per block + classifier).
    flops, n = 0, n0
    for p in params["blocks"]:
        cin_b, cout_b = int(p["w"].shape[1]), int(p["w"].shape[2])
        flops += 3 * 2 * (n - 2) * cin_b * cout_b
        n -= 3
    flops += 2 * B * n_final * C_last + 2 * B * C_last * 128
    bytes_accessed = sum(int(a.size) * a.dtype.itemsize for a in args) + B * 128 * 4

    vmem_spec = pl.BlockSpec(memory_space=pltpu.MemorySpace.VMEM)
    out = pl.pallas_call(
        _fused_audio_cnn_kernel,
        out_shape=jax.ShapeDtypeStruct((B, 128), jnp.float32),
        in_specs=[vmem_spec] * len(args),
        out_specs=vmem_spec,
        cost_estimate=pl.CostEstimate(flops=flops, transcendentals=0,
                                      bytes_accessed=bytes_accessed),
    )(*args)
    return out[:, :num_classes]


# --------------------------- Parameter creation ----------------------------- #

def make_params(key, num_classes=8):
    """Deterministic synthetic parameters; conv bias + BN pre-folded, weights
    kept in per-tap form (3, Cin, Cout)."""
    chans = [10, 64, 128, 256, 128]
    eps = 1e-5
    blocks = []
    for i in range(4):
        cin, cout = chans[i], chans[i + 1]
        key, kw, kb, kg, kbe, km, kv = jax.random.split(key, 7)
        w = jax.random.normal(kw, (3, cin, cout), jnp.float32) * 0.05
        bias = jax.random.normal(kb, (cout,), jnp.float32) * 0.05
        gamma = 1.0 + 0.1 * jax.random.normal(kg, (cout,), jnp.float32)
        beta = 0.1 * jax.random.normal(kbe, (cout,), jnp.float32)
        running_mean = 0.1 * jax.random.normal(km, (cout,), jnp.float32)
        running_var = jax.random.uniform(kv, (cout,), jnp.float32, 0.5, 1.5)
        scale = gamma / jnp.sqrt(running_var + eps)
        shift = beta + (bias - running_mean) * scale
        blocks.append(dict(w=w, scale=scale, shift=shift))
    key, kfw, kfb = jax.random.split(key, 3)
    fc_w = jax.random.normal(kfw, (128, num_classes), jnp.float32) * 0.05
    fc_b = jax.random.normal(kfb, (num_classes,), jnp.float32) * 0.05
    return dict(blocks=blocks, fc_w=fc_w, fc_b=fc_b)


# ---------------------------- Plain-JAX reference --------------------------- #

def reference_forward(x_ncw, params):
    """Pure-f32 reference of the module's forward pass (eval-mode BN folded)."""
    x = jnp.transpose(x_ncw, (0, 2, 1)).astype(jnp.float32)    # (B, L, C)
    for p in params["blocks"]:
        w = p["w"]                                             # (3, Cin, Cout)
        lc = x.shape[1] - 2
        y = (jnp.einsum("blc,cd->bld", x[:, 0:lc, :], w[0])
             + jnp.einsum("blc,cd->bld", x[:, 1:lc + 1, :], w[1])
             + jnp.einsum("blc,cd->bld", x[:, 2:lc + 2, :], w[2]))
        y = jnp.maximum(y * p["scale"][None, None, :] + p["shift"][None, None, :], 0.0)
        x = jnp.maximum(y[:, :-1, :], y[:, 1:, :])             # MaxPool1d(2, 1)
    m = jnp.mean(x, axis=1)                                    # mean over time
    return m @ params["fc_w"] + params["fc_b"][None, :]


# --------------------------------- Main ------------------------------------ #

if __name__ == "__main__":
    key = jax.random.PRNGKey(0)
    key, kx = jax.random.split(key)

    B, Cin, T = 2, 10, 32      # 4 blocks each shrink length by 3 -> 20 valid steps
    x = jax.random.normal(kx, (B, Cin, T), jnp.float32)        # PyTorch NCW layout

    params = make_params(key, num_classes=8)

    out = audio_cnn_pool_forward(x, params)
    out = jax.block_until_ready(out)

    ref = reference_forward(x, params)
    assert out.shape == (B, 8), out.shape
    # Kernel feeds the MXU bf16 operands (f32 accumulation); compare against the
    # pure-f32 reference with a tolerance that accommodates bf16 input rounding.
    assert jnp.allclose(out, ref, rtol=5e-2, atol=5e-3), (out, ref)

    print("KERNEL_OK")
</pallas_src>

<mosaic_0001>
module attributes {stable_mosaic.version = 11 : i64} {
  func.func @_fused_audio_cnn_kernel(%arg0: memref<64x10xf32, #tpu.memory_space<vmem>>, %arg1: memref<3x10x64xbf16, #tpu.memory_space<vmem>>, %arg2: memref<1x64xf32, #tpu.memory_space<vmem>>, %arg3: memref<1x64xf32, #tpu.memory_space<vmem>>, %arg4: memref<3x64x128xbf16, #tpu.memory_space<vmem>>, %arg5: memref<1x128xf32, #tpu.memory_space<vmem>>, %arg6: memref<1x128xf32, #tpu.memory_space<vmem>>, %arg7: memref<3x128x256xbf16, #tpu.memory_space<vmem>>, %arg8: memref<1x256xf32, #tpu.memory_space<vmem>>, %arg9: memref<1x256xf32, #tpu.memory_space<vmem>>, %arg10: memref<3x256x128xbf16, #tpu.memory_space<vmem>>, %arg11: memref<1x128xf32, #tpu.memory_space<vmem>>, %arg12: memref<1x128xf32, #tpu.memory_space<vmem>>, %arg13: memref<2x52xbf16, #tpu.memory_space<vmem>>, %arg14: memref<128x128xbf16, #tpu.memory_space<vmem>>, %arg15: memref<1x128xf32, #tpu.memory_space<vmem>>, %arg16: memref<2x128xf32, #tpu.memory_space<vmem>>) attributes {dimension_semantics = [], scalar_prefetch = 0 : i64, scratch_operands = 0 : i64, tpu.core_type = #tpu.core_type<tc>} {
    %c0 = arith.constant 0 : index
    %c0_0 = arith.constant 0 : index
    %0 = vector.load %arg0[%c0, %c0_0] : memref<64x10xf32, #tpu.memory_space<vmem>>, vector<64x10xf32>
    %1 = vector.extract_strided_slice %0 {offsets = [0, 0], sizes = [62, 10], strides = [1, 1]} : vector<64x10xf32> to vector<62x10xf32>
    %2 = arith.truncf %1 : vector<62x10xf32> to vector<62x10xbf16>
    %c0_1 = arith.constant 0 : index
    %c0_2 = arith.constant 0 : index
    %c0_3 = arith.constant 0 : index
    %3 = vector.load %arg1[%c0_1, %c0_2, %c0_3] : memref<3x10x64xbf16, #tpu.memory_space<vmem>>, vector<1x10x64xbf16>
    %4 = vector.shape_cast %3 : vector<1x10x64xbf16> to vector<10x64xbf16>
    %cst = arith.constant dense<0.000000e+00> : vector<62x64xf32>
    %5 = tpu.matmul %2, %4, %cst {dimension_numbers = #tpu.dot_dimension_numbers<[1], [0], [0], [1], [0, 0, 1, 1], [], []>} : vector<62x10xbf16>, vector<10x64xbf16>, vector<62x64xf32> -> vector<62x64xf32>
    %6 = vector.extract_strided_slice %0 {offsets = [1, 0], sizes = [62, 10], strides = [1, 1]} : vector<64x10xf32> to vector<62x10xf32>
    %7 = arith.truncf %6 : vector<62x10xf32> to vector<62x10xbf16>
    %c1 = arith.constant 1 : index
    %c0_4 = arith.constant 0 : index
    %c0_5 = arith.constant 0 : index
    %8 = vector.load %arg1[%c1, %c0_4, %c0_5] : memref<3x10x64xbf16, #tpu.memory_space<vmem>>, vector<1x10x64xbf16>
    %9 = vector.shape_cast %8 : vector<1x10x64xbf16> to vector<10x64xbf16>
    %cst_6 = arith.constant dense<0.000000e+00> : vector<62x64xf32>
    %10 = tpu.matmul %7, %9, %cst_6 {dimension_numbers = #tpu.dot_dimension_numbers<[1], [0], [0], [1], [0, 0, 1, 1], [], []>} : vector<62x10xbf16>, vector<10x64xbf16>, vector<62x64xf32> -> vector<62x64xf32>
    %11 = arith.addf %5, %10 : vector<62x64xf32>
    %12 = vector.extract_strided_slice %0 {offsets = [2, 0], sizes = [62, 10], strides = [1, 1]} : vector<64x10xf32> to vector<62x10xf32>
    %13 = arith.truncf %12 : vector<62x10xf32> to vector<62x10xbf16>
    %c2 = arith.constant 2 : index
    %c0_7 = arith.constant 0 : index
    %c0_8 = arith.constant 0 : index
    %14 = vector.load %arg1[%c2, %c0_7, %c0_8] : memref<3x10x64xbf16, #tpu.memory_space<vmem>>, vector<1x10x64xbf16>
    %15 = vector.shape_cast %14 : vector<1x10x64xbf16> to vector<10x64xbf16>
    %cst_9 = arith.constant dense<0.000000e+00> : vector<62x64xf32>
    %16 = tpu.matmul %13, %15, %cst_9 {dimension_numbers = #tpu.dot_dimension_numbers<[1], [0], [0], [1], [0, 0, 1, 1], [], []>} : vector<62x10xbf16>, vector<10x64xbf16>, vector<62x64xf32> -> vector<62x64xf32>
    %17 = arith.addf %11, %16 : vector<62x64xf32>
    %c0_10 = arith.constant 0 : index
    %c0_11 = arith.constant 0 : index
    %18 = vector.load %arg2[%c0_10, %c0_11] : memref<1x64xf32, #tpu.memory_space<vmem>>, vector<1x64xf32>
    %19 = vector.broadcast %18 : vector<1x64xf32> to vector<62x64xf32>
    %20 = arith.mulf %17, %19 : vector<62x64xf32>
    %c0_12 = arith.constant 0 : index
    %c0_13 = arith.constant 0 : index
    %21 = vector.load %arg3[%c0_12, %c0_13] : memref<1x64xf32, #tpu.memory_space<vmem>>, vector<1x64xf32>
    %22 = vector.broadcast %21 : vector<1x64xf32> to vector<62x64xf32>
    %23 = arith.addf %20, %22 : vector<62x64xf32>
    %cst_14 = arith.constant 0.000000e+00 : f32
    %24 = vector.broadcast %cst_14 : f32 to vector<62x64xf32>
    %25 = arith.maximumf %23, %24 : vector<62x64xf32>
    %26 = vector.extract_strided_slice %25 {offsets = [0, 0], sizes = [61, 64], strides = [1, 1]} : vector<62x64xf32> to vector<61x64xf32>
    %27 = vector.extract_strided_slice %25 {offsets = [1, 0], sizes = [61, 64], strides = [1, 1]} : vector<62x64xf32> to vector<61x64xf32>
    %28 = arith.maximumf %26, %27 : vector<61x64xf32>
    %29 = vector.extract_strided_slice %28 {offsets = [0, 0], sizes = [59, 64], strides = [1, 1]} : vector<61x64xf32> to vector<59x64xf32>
    %30 = arith.truncf %29 : vector<59x64xf32> to vector<59x64xbf16>
    %c0_15 = arith.constant 0 : index
    %c0_16 = arith.constant 0 : index
    %c0_17 = arith.constant 0 : index
    %31 = vector.load %arg4[%c0_15, %c0_16, %c0_17] : memref<3x64x128xbf16, #tpu.memory_space<vmem>>, vector<1x64x128xbf16>
    %32 = vector.shape_cast %31 : vector<1x64x128xbf16> to vector<64x128xbf16>
    %cst_18 = arith.constant dense<0.000000e+00> : vector<59x128xf32>
    %33 = tpu.matmul %30, %32, %cst_18 {dimension_numbers = #tpu.dot_dimension_numbers<[1], [0], [0], [1], [0, 0, 1, 1], [], []>} : vector<59x64xbf16>, vector<64x128xbf16>, vector<59x128xf32> -> vector<59x128xf32>
    %34 = vector.extract_strided_slice %28 {offsets = [1, 0], sizes = [59, 64], strides = [1, 1]} : vector<61x64xf32> to vector<59x64xf32>
    %35 = arith.truncf %34 : vector<59x64xf32> to vector<59x64xbf16>
    %c1_19 = arith.constant 1 : index
    %c0_20 = arith.constant 0 : index
    %c0_21 = arith.constant 0 : index
    %36 = vector.load %arg4[%c1_19, %c0_20, %c0_21] : memref<3x64x128xbf16, #tpu.memory_space<vmem>>, vector<1x64x128xbf16>
    %37 = vector.shape_cast %36 : vector<1x64x128xbf16> to vector<64x128xbf16>
    %cst_22 = arith.constant dense<0.000000e+00> : vector<59x128xf32>
    %38 = tpu.matmul %35, %37, %cst_22 {dimension_numbers = #tpu.dot_dimension_numbers<[1], [0], [0], [1], [0, 0, 1, 1], [], []>} : vector<59x64xbf16>, vector<64x128xbf16>, vector<59x128xf32> -> vector<59x128xf32>
    %39 = arith.addf %33, %38 : vector<59x128xf32>
    %40 = vector.extract_strided_slice %28 {offsets = [2, 0], sizes = [59, 64], strides = [1, 1]} : vector<61x64xf32> to vector<59x64xf32>
    %41 = arith.truncf %40 : vector<59x64xf32> to vector<59x64xbf16>
    %c2_23 = arith.constant 2 : index
    %c0_24 = arith.constant 0 : index
    %c0_25 = arith.constant 0 : index
    %42 = vector.load %arg4[%c2_23, %c0_24, %c0_25] : memref<3x64x128xbf16, #tpu.memory_space<vmem>>, vector<1x64x128xbf16>
    %43 = vector.shape_cast %42 : vector<1x64x128xbf16> to vector<64x128xbf16>
    %cst_26 = arith.constant dense<0.000000e+00> : vector<59x128xf32>
    %44 = tpu.matmul %41, %43, %cst_26 {dimension_numbers = #tpu.dot_dimension_numbers<[1], [0], [0], [1], [0, 0, 1, 1], [], []>} : vector<59x64xbf16>, vector<64x128xbf16>, vector<59x128xf32> -> vector<59x128xf32>
    %45 = arith.addf %39, %44 : vector<59x128xf32>
    %c0_27 = arith.constant 0 : index
    %c0_28 = arith.constant 0 : index
    %46 = vector.load %arg5[%c0_27, %c0_28] : memref<1x128xf32, #tpu.memory_space<vmem>>, vector<1x128xf32>
    %47 = vector.broadcast %46 : vector<1x128xf32> to vector<59x128xf32>
    %48 = arith.mulf %45, %47 : vector<59x128xf32>
    %c0_29 = arith.constant 0 : index
    %c0_30 = arith.constant 0 : index
    %49 = vector.load %arg6[%c0_29, %c0_30] : memref<1x128xf32, #tpu.memory_space<vmem>>, vector<1x128xf32>
    %50 = vector.broadcast %49 : vector<1x128xf32> to vector<59x128xf32>
    %51 = arith.addf %48, %50 : vector<59x128xf32>
    %cst_31 = arith.constant 0.000000e+00 : f32
    %52 = vector.broadcast %cst_31 : f32 to vector<59x128xf32>
    %53 = arith.maximumf %51, %52 : vector<59x128xf32>
    %54 = vector.extract_strided_slice %53 {offsets = [0, 0], sizes = [58, 128], strides = [1, 1]} : vector<59x128xf32> to vector<58x128xf32>
    %55 = vector.extract_strided_slice %53 {offsets = [1, 0], sizes = [58, 128], strides = [1, 1]} : vector<59x128xf32> to vector<58x128xf32>
    %56 = arith.maximumf %54, %55 : vector<58x128xf32>
    %57 = vector.extract_strided_slice %56 {offsets = [0, 0], sizes = [56, 128], strides = [1, 1]} : vector<58x128xf32> to vector<56x128xf32>
    %58 = arith.truncf %57 : vector<56x128xf32> to vector<56x128xbf16>
    %c0_32 = arith.constant 0 : index
    %c0_33 = arith.constant 0 : index
    %c0_34 = arith.constant 0 : index
    %59 = vector.load %arg7[%c0_32, %c0_33, %c0_34] : memref<3x128x256xbf16, #tpu.memory_space<vmem>>, vector<1x128x256xbf16>
    %60 = vector.shape_cast %59 : vector<1x128x256xbf16> to vector<128x256xbf16>
    %cst_35 = arith.constant dense<0.000000e+00> : vector<56x256xf32>
    %61 = tpu.matmul %58, %60, %cst_35 {dimension_numbers = #tpu.dot_dimension_numbers<[1], [0], [0], [1], [0, 0, 1, 1], [], []>} : vector<56x128xbf16>, vector<128x256xbf16>, vector<56x256xf32> -> vector<56x256xf32>
    %62 = vector.extract_strided_slice %56 {offsets = [1, 0], sizes = [56, 128], strides = [1, 1]} : vector<58x128xf32> to vector<56x128xf32>
    %63 = arith.truncf %62 : vector<56x128xf32> to vector<56x128xbf16>
    %c1_36 = arith.constant 1 : index
    %c0_37 = arith.constant 0 : index
    %c0_38 = arith.constant 0 : index
    %64 = vector.load %arg7[%c1_36, %c0_37, %c0_38] : memref<3x128x256xbf16, #tpu.memory_space<vmem>>, vector<1x128x256xbf16>
    %65 = vector.shape_cast %64 : vector<1x128x256xbf16> to vector<128x256xbf16>
    %cst_39 = arith.constant dense<0.000000e+00> : vector<56x256xf32>
    %66 = tpu.matmul %63, %65, %cst_39 {dimension_numbers = #tpu.dot_dimension_numbers<[1], [0], [0], [1], [0, 0, 1, 1], [], []>} : vector<56x128xbf16>, vector<128x256xbf16>, vector<56x256xf32> -> vector<56x256xf32>
    %67 = arith.addf %61, %66 : vector<56x256xf32>
    %68 = vector.extract_strided_slice %56 {offsets = [2, 0], sizes = [56, 128], strides = [1, 1]} : vector<58x128xf32> to vector<56x128xf32>
    %69 = arith.truncf %68 : vector<56x128xf32> to vector<56x128xbf16>
    %c2_40 = arith.constant 2 : index
    %c0_41 = arith.constant 0 : index
    %c0_42 = arith.constant 0 : index
    %70 = vector.load %arg7[%c2_40, %c0_41, %c0_42] : memref<3x128x256xbf16, #tpu.memory_space<vmem>>, vector<1x128x256xbf16>
    %71 = vector.shape_cast %70 : vector<1x128x256xbf16> to vector<128x256xbf16>
    %cst_43 = arith.constant dense<0.000000e+00> : vector<56x256xf32>
    %72 = tpu.matmul %69, %71, %cst_43 {dimension_numbers = #tpu.dot_dimension_numbers<[1], [0], [0], [1], [0, 0, 1, 1], [], []>} : vector<56x128xbf16>, vector<128x256xbf16>, vector<56x256xf32> -> vector<56x256xf32>
    %73 = arith.addf %67, %72 : vector<56x256xf32>
    %c0_44 = arith.constant 0 : index
    %c0_45 = arith.constant 0 : index
    %74 = vector.load %arg8[%c0_44, %c0_45] : memref<1x256xf32, #tpu.memory_space<vmem>>, vector<1x256xf32>
    %75 = vector.broadcast %74 : vector<1x256xf32> to vector<56x256xf32>
    %76 = arith.mulf %73, %75 : vector<56x256xf32>
    %c0_46 = arith.constant 0 : index
    %c0_47 = arith.constant 0 : index
    %77 = vector.load %arg9[%c0_46, %c0_47] : memref<1x256xf32, #tpu.memory_space<vmem>>, vector<1x256xf32>
    %78 = vector.broadcast %77 : vector<1x256xf32> to vector<56x256xf32>
    %79 = arith.addf %76, %78 : vector<56x256xf32>
    %cst_48 = arith.constant 0.000000e+00 : f32
    %80 = vector.broadcast %cst_48 : f32 to vector<56x256xf32>
    %81 = arith.maximumf %79, %80 : vector<56x256xf32>
    %82 = vector.extract_strided_slice %81 {offsets = [0, 0], sizes = [55, 256], strides = [1, 1]} : vector<56x256xf32> to vector<55x256xf32>
    %83 = vector.extract_strided_slice %81 {offsets = [1, 0], sizes = [55, 256], strides = [1, 1]} : vector<56x256xf32> to vector<55x256xf32>
    %84 = arith.maximumf %82, %83 : vector<55x256xf32>
    %85 = vector.extract_strided_slice %84 {offsets = [0, 0], sizes = [53, 256], strides = [1, 1]} : vector<55x256xf32> to vector<53x256xf32>
    %86 = arith.truncf %85 : vector<53x256xf32> to vector<53x256xbf16>
    %c0_49 = arith.constant 0 : index
    %c0_50 = arith.constant 0 : index
    %c0_51 = arith.constant 0 : index
    %87 = vector.load %arg10[%c0_49, %c0_50, %c0_51] : memref<3x256x128xbf16, #tpu.memory_space<vmem>>, vector<1x256x128xbf16>
    %88 = vector.shape_cast %87 : vector<1x256x128xbf16> to vector<256x128xbf16>
    %cst_52 = arith.constant dense<0.000000e+00> : vector<53x128xf32>
    %89 = tpu.matmul %86, %88, %cst_52 {dimension_numbers = #tpu.dot_dimension_numbers<[1], [0], [0], [1], [0, 0, 1, 1], [], []>} : vector<53x256xbf16>, vector<256x128xbf16>, vector<53x128xf32> -> vector<53x128xf32>
    %90 = vector.extract_strided_slice %84 {offsets = [1, 0], sizes = [53, 256], strides = [1, 1]} : vector<55x256xf32> to vector<53x256xf32>
    %91 = arith.truncf %90 : vector<53x256xf32> to vector<53x256xbf16>
    %c1_53 = arith.constant 1 : index
    %c0_54 = arith.constant 0 : index
    %c0_55 = arith.constant 0 : index
    %92 = vector.load %arg10[%c1_53, %c0_54, %c0_55] : memref<3x256x128xbf16, #tpu.memory_space<vmem>>, vector<1x256x128xbf16>
    %93 = vector.shape_cast %92 : vector<1x256x128xbf16> to vector<256x128xbf16>
    %cst_56 = arith.constant dense<0.000000e+00> : vector<53x128xf32>
    %94 = tpu.matmul %91, %93, %cst_56 {dimension_numbers = #tpu.dot_dimension_numbers<[1], [0], [0], [1], [0, 0, 1, 1], [], []>} : vector<53x256xbf16>, vector<256x128xbf16>, vector<53x128xf32> -> vector<53x128xf32>
    %95 = arith.addf %89, %94 : vector<53x128xf32>
    %96 = vector.extract_strided_slice %84 {offsets = [2, 0], sizes = [53, 256], strides = [1, 1]} : vector<55x256xf32> to vector<53x256xf32>
    %97 = arith.truncf %96 : vector<53x256xf32> to vector<53x256xbf16>
    %c2_57 = arith.constant 2 : index
    %c0_58 = arith.constant 0 : index
    %c0_59 = arith.constant 0 : index
    %98 = vector.load %arg10[%c2_57, %c0_58, %c0_59] : memref<3x256x128xbf16, #tpu.memory_space<vmem>>, vector<1x256x128xbf16>
    %99 = vector.shape_cast %98 : vector<1x256x128xbf16> to vector<256x128xbf16>
    %cst_60 = arith.constant dense<0.000000e+00> : vector<53x128xf32>
    %100 = tpu.matmul %97, %99, %cst_60 {dimension_numbers = #tpu.dot_dimension_numbers<[1], [0], [0], [1], [0, 0, 1, 1], [], []>} : vector<53x256xbf16>, vector<256x128xbf16>, vector<53x128xf32> -> vector<53x128xf32>
    %101 = arith.addf %95, %100 : vector<53x128xf32>
    %c0_61 = arith.constant 0 : index
    %c0_62 = arith.constant 0 : index
    %102 = vector.load %arg11[%c0_61, %c0_62] : memref<1x128xf32, #tpu.memory_space<vmem>>, vector<1x128xf32>
    %103 = vector.broadcast %102 : vector<1x128xf32> to vector<53x128xf32>
    %104 = arith.mulf %101, %103 : vector<53x128xf32>
    %c0_63 = arith.constant 0 : index
    %c0_64 = arith.constant 0 : index
    %105 = vector.load %arg12[%c0_63, %c0_64] : memref<1x128xf32, #tpu.memory_space<vmem>>, vector<1x128xf32>
    %106 = vector.broadcast %105 : vector<1x128xf32> to vector<53x128xf32>
    %107 = arith.addf %104, %106 : vector<53x128xf32>
    %cst_65 = arith.constant 0.000000e+00 : f32
    %108 = vector.broadcast %cst_65 : f32 to vector<53x128xf32>
    %109 = arith.maximumf %107, %108 : vector<53x128xf32>
    %110 = vector.extract_strided_slice %109 {offsets = [0, 0], sizes = [52, 128], strides = [1, 1]} : vector<53x128xf32> to vector<52x128xf32>
    %111 = vector.extract_strided_slice %109 {offsets = [1, 0], sizes = [52, 128], strides = [1, 1]} : vector<53x128xf32> to vector<52x128xf32>
    %112 = arith.maximumf %110, %111 : vector<52x128xf32>
    %c0_66 = arith.constant 0 : index
    %c0_67 = arith.constant 0 : index
    %113 = vector.load %arg13[%c0_66, %c0_67] : memref<2x52xbf16, #tpu.memory_space<vmem>>, vector<2x52xbf16>
    %114 = arith.truncf %112 : vector<52x128xf32> to vector<52x128xbf16>
    %cst_68 = arith.constant dense<0.000000e+00> : vector<2x128xf32>
    %115 = tpu.matmul %113, %114, %cst_68 {dimension_numbers = #tpu.dot_dimension_numbers<[1], [0], [0], [1], [0, 0, 1, 1], [], []>} : vector<2x52xbf16>, vector<52x128xbf16>, vector<2x128xf32> -> vector<2x128xf32>
    %116 = arith.truncf %115 : vector<2x128xf32> to vector<2x128xbf16>
    %c0_69 = arith.constant 0 : index
    %c0_70 = arith.constant 0 : index
    %117 = vector.load %arg14[%c0_69, %c0_70] : memref<128x128xbf16, #tpu.memory_space<vmem>>, vector<128x128xbf16>
    %cst_71 = arith.constant dense<0.000000e+00> : vector<2x128xf32>
    %118 = tpu.matmul %116, %117, %cst_71 {dimension_numbers = #tpu.dot_dimension_numbers<[1], [0], [0], [1], [0, 0, 1, 1], [], []>} : vector<2x128xbf16>, vector<128x128xbf16>, vector<2x128xf32> -> vector<2x128xf32>
    %c0_72 = arith.constant 0 : index
    %c0_73 = arith.constant 0 : index
    %119 = vector.load %arg15[%c0_72, %c0_73] : memref<1x128xf32, #tpu.memory_space<vmem>>, vector<1x128xf32>
    %120 = vector.broadcast %119 : vector<1x128xf32> to vector<2x128xf32>
    %121 = arith.addf %118, %120 : vector<2x128xf32>
    %c0_74 = arith.constant 0 : index
    %c0_75 = arith.constant 0 : index
    %122 = vector.load %arg16[%c0_74, %c0_75] : memref<2x128xf32, #tpu.memory_space<vmem>>, vector<2x128xf32>
    tpu.vector_store %arg16[%c0_74, %c0_75], %121 {strides = array<i32>} : memref<2x128xf32, #tpu.memory_space<vmem>>, vector<2x128xf32>,
    return
  }
}

</mosaic_0001>

<llo_original>
// kernel: audio_cnn_pool_forward.1
$region0: #{audio_cnn_pool_forward.1}
  #allocation0 [shape = 'u32[]', space=smem, size = 0x4, offset = 0x4, fixed_abs, tag = 'smem constant byte address 0x4 - core index']
  #allocation1 [shape = 'u32[72,128]{1,0:T(1,128)}', space=vmem, size = 0x9000, scoped, tag = 'internal scratch']
  %s0 = inlined_call_operand.vmem [shape: f32[64,10], index: 0, kind: input, shape index: {}]
  %s1 = inlined_call_operand.vmem [shape: bf16[3,10,64], index: 1, kind: input, shape index: {}]
  %s2 = inlined_call_operand.vmem [shape: f32[1,64], index: 2, kind: input, shape index: {}]
  %s3 = inlined_call_operand.vmem [shape: f32[1,64], index: 3, kind: input, shape index: {}]
  %s4 = inlined_call_operand.vmem [shape: bf16[3,64,128], index: 4, kind: input, shape index: {}]
  %s5 = inlined_call_operand.vmem [shape: f32[1,128], index: 5, kind: input, shape index: {}]
  %s6 = inlined_call_operand.vmem [shape: f32[1,128], index: 6, kind: input, shape index: {}]
  %s7 = inlined_call_operand.vmem [shape: bf16[3,128,256], index: 7, kind: input, shape index: {}]
  %s8 = inlined_call_operand.vmem [shape: f32[1,256], index: 8, kind: input, shape index: {}]
  %s9 = inlined_call_operand.vmem [shape: f32[1,256], index: 9, kind: input, shape index: {}]
  %s10 = inlined_call_operand.vmem [shape: bf16[3,256,128], index: 10, kind: input, shape index: {}]
  %s11 = inlined_call_operand.vmem [shape: f32[1,128], index: 11, kind: input, shape index: {}]
  %s12 = inlined_call_operand.vmem [shape: f32[1,128], index: 12, kind: input, shape index: {}]
  %s13 = inlined_call_operand.vmem [shape: bf16[2,52], index: 13, kind: input, shape index: {}]
  %s14 = inlined_call_operand.vmem [shape: bf16[128,128], index: 14, kind: input, shape index: {}]
  %s15 = inlined_call_operand.vmem [shape: f32[1,128], index: 15, kind: input, shape index: {}]
  %s16 = inlined_call_operand.hbm [shape: f32[2,128], index: 16, kind: output, shape index: {}]
  %s17 = sld [smem:[#allocation0]]
  $region74: #{audio_cnn_pool_forward.1} parent=0
    _
  %s19 = ssub.s32 1, %s17
  %s20 = scalar_select 0, %s19, %s17
  $region1: #{audio_cnn_pool_forward.1} parent=0
    #allocation2 [shape = 'u8[1024]{0}', space=vmem, size = 0x400, scoped, tag = 'output window, operand 0, single buffered']
    #allocation3 [shape = 's32[1]{0}', space=sflag, size = 0x4, scoped, tag = 'scoped memory for audio_cnn_pool_forward.1']
    %21 = vsyncpa [#allocation3], 0
    // Predicated region
    $region2: #{audio_cnn_pool_forward.1} parent=1 // pred_check
      _
    $region3: #{audio_cnn_pool_forward.1} parent=1 // pred_check_branch
      %23 = sbr.rel (0) target = $region5
    $region4: #{audio_cnn_pool_forward.1} parent=1 // pred_region
      _
    $region5: #{audio_cnn_pool_forward.1} parent=1 // pred_fallthru
      _
    // Predicated region
    $region6: #{audio_cnn_pool_forward.1} parent=1 // pred_check
      _
    $region7: #{audio_cnn_pool_forward.1} parent=1 // pred_check_branch
      %25 = sbr.rel (0) target = $region9
    $region8: #{audio_cnn_pool_forward.1} parent=1 // pred_region
      _
    $region9: #{audio_cnn_pool_forward.1} parent=1 // pred_fallthru
      _
    // Predicated region
    $region10: #{audio_cnn_pool_forward.1} parent=1 // pred_check
      _
    $region11: #{audio_cnn_pool_forward.1} parent=1 // pred_check_branch
      %27 = sbr.rel (0) target = $region13
    $region12: #{audio_cnn_pool_forward.1} parent=1 // pred_region
      _
    $region13: #{audio_cnn_pool_forward.1} parent=1 // pred_fallthru
      _
    // Predicated region
    $region14: #{audio_cnn_pool_forward.1} parent=1 // pred_check
      _
    $region15: #{audio_cnn_pool_forward.1} parent=1 // pred_check_branch
      %29 = sbr.rel (0) target = $region17
    $region16: #{audio_cnn_pool_forward.1} parent=1 // pred_region
      _
    $region17: #{audio_cnn_pool_forward.1} parent=1 // pred_fallthru
      _
    // Predicated region
    $region18: #{audio_cnn_pool_forward.1} parent=1 // pred_check
      _
    $region19: #{audio_cnn_pool_forward.1} parent=1 // pred_check_branch
      %31 = sbr.rel (0) target = $region21
    $region20: #{audio_cnn_pool_forward.1} parent=1 // pred_region
      _
    $region21: #{audio_cnn_pool_forward.1} parent=1 // pred_fallthru
      _
    // Predicated region
    $region22: #{audio_cnn_pool_forward.1} parent=1 // pred_check
      _
    $region23: #{audio_cnn_pool_forward.1} parent=1 // pred_check_branch
      %33 = sbr.rel (0) target = $region25
    $region24: #{audio_cnn_pool_forward.1} parent=1 // pred_region
      _
    $region25: #{audio_cnn_pool_forward.1} parent=1 // pred_fallthru
      _
    // Predicated region
    $region26: #{audio_cnn_pool_forward.1} parent=1 // pred_check
      _
    $region27: #{audio_cnn_pool_forward.1} parent=1 // pred_check_branch
      %35 = sbr.rel (0) target = $region29
    $region28: #{audio_cnn_pool_forward.1} parent=1 // pred_region
      _
    $region29: #{audio_cnn_pool_forward.1} parent=1 // pred_fallthru
      _
    // Predicated region
    $region30: #{audio_cnn_pool_forward.1} parent=1 // pred_check
      _
    $region31: #{audio_cnn_pool_forward.1} parent=1 // pred_check_branch
      %37 = sbr.rel (0) target = $region33
    $region32: #{audio_cnn_pool_forward.1} parent=1 // pred_region
      _
    $region33: #{audio_cnn_pool_forward.1} parent=1 // pred_fallthru
      _
    // Predicated region
    $region34: #{audio_cnn_pool_forward.1} parent=1 // pred_check
      _
    $region35: #{audio_cnn_pool_forward.1} parent=1 // pred_check_branch
      %39 = sbr.rel (0) target = $region37
    $region36: #{audio_cnn_pool_forward.1} parent=1 // pred_region
      _
    $region37: #{audio_cnn_pool_forward.1} parent=1 // pred_fallthru
      _
    // Predicated region
    $region38: #{audio_cnn_pool_forward.1} parent=1 // pred_check
      _
    $region39: #{audio_cnn_pool_forward.1} parent=1 // pred_check_branch
      %41 = sbr.rel (0) target = $region41
    $region40: #{audio_cnn_pool_forward.1} parent=1 // pred_region
      _
    $region41: #{audio_cnn_pool_forward.1} parent=1 // pred_fallthru
      _
    // Predicated region
    $region42: #{audio_cnn_pool_forward.1} parent=1 // pred_check
      _
    $region43: #{audio_cnn_pool_forward.1} parent=1 // pred_check_branch
      %43 = sbr.rel (0) target = $region45
    $region44: #{audio_cnn_pool_forward.1} parent=1 // pred_region
      _
    $region45: #{audio_cnn_pool_forward.1} parent=1 // pred_fallthru
      _
    // Predicated region
    $region46: #{audio_cnn_pool_forward.1} parent=1 // pred_check
      _
    $region47: #{audio_cnn_pool_forward.1} parent=1 // pred_check_branch
      %45 = sbr.rel (0) target = $region49
    $region48: #{audio_cnn_pool_forward.1} parent=1 // pred_region
      _
    $region49: #{audio_cnn_pool_forward.1} parent=1 // pred_fallthru
      _
    // Predicated region
    $region50: #{audio_cnn_pool_forward.1} parent=1 // pred_check
      _
    $region51: #{audio_cnn_pool_forward.1} parent=1 // pred_check_branch
      %47 = sbr.rel (0) target = $region53
    $region52: #{audio_cnn_pool_forward.1} parent=1 // pred_region
      _
    $region53: #{audio_cnn_pool_forward.1} parent=1 // pred_fallthru
      _
    // Predicated region
    $region54: #{audio_cnn_pool_forward.1} parent=1 // pred_check
      _
    $region55: #{audio_cnn_pool_forward.1} parent=1 // pred_check_branch
      %49 = sbr.rel (0) target = $region57
    $region56: #{audio_cnn_pool_forward.1} parent=1 // pred_region
      _
    $region57: #{audio_cnn_pool_forward.1} parent=1 // pred_fallthru
      _
    // Predicated region
    $region58: #{audio_cnn_pool_forward.1} parent=1 // pred_check
      _
    $region59: #{audio_cnn_pool_forward.1} parent=1 // pred_check_branch
      %51 = sbr.rel (0) target = $region61
    $region60: #{audio_cnn_pool_forward.1} parent=1 // pred_region
      _
    $region61: #{audio_cnn_pool_forward.1} parent=1 // pred_fallthru
      _
    // Predicated region
    $region62: #{audio_cnn_pool_forward.1} parent=1 // pred_check
      _
    $region63: #{audio_cnn_pool_forward.1} parent=1 // pred_check_branch
      %53 = sbr.rel (0) target = $region65
    $region64: #{audio_cnn_pool_forward.1} parent=1 // pred_region
      _
    $region65: #{audio_cnn_pool_forward.1} parent=1 // pred_fallthru
      _
    %v55 = vld [vmem:[%s0] sm:$0xff]
    %v56 = vld [vmem:[%s0 + $0x8] sm:$0xff]
    %v57 = vld [vmem:[%s0 + $0x10] sm:$0xff]
    %v58 = vld [vmem:[%s0 + $0x18] sm:$0xff]
    %v59 = vld [vmem:[%s0 + $0x20] sm:$0xff]
    %v60 = vld [vmem:[%s0 + $0x28] sm:$0xff]
    %v61 = vld [vmem:[%s0 + $0x30] sm:$0xff]
    %v62 = vld [vmem:[%s0 + $0x38] sm:$0xff]
    %v63 = vpack.c.bf16 %v56, %v55
    %v64 = vpack.c.bf16 %v58, %v57
    %v65 = vpack.c.bf16 %v60, %v59
    %v66 = vpack.c.bf16 %v62, %v61
    %v67 = vld [vmem:[%s1] sm:$0xf]
    %v68 = vld [vmem:[%s1 + $0x4] sm:$0x1]
    %s69 = scalar_lea.vmem %s1, 8
    %v70 = vld [vmem:[%s69] sm:$0xf]
    %v71 = vld [vmem:[%s69 + $0x4] sm:$0x1]
    %vm72 = vsmask.f32 7424
    %v74 = vshrl.u32 %v63, 16
    %v76 = vshll.u32 %v63, 16
    %v78 = vrot.slane %v76, 1
    %v79 = vor.u32 %v74, %v78
    %v81 = vshll.u32 %v64, 16
    %v83 = vrot.slane %v81, 1
    %v84 = vsel %vm72, %v79, %v83
    %v85 = vshrl.u32 %v64, 16
    %v87 = vor.u32 %v85, %v83
    %v89 = vshll.u32 %v65, 16
    %v91 = vrot.slane %v89, 1
    %v92 = vsel %vm72, %v87, %v91
    %v93 = vshrl.u32 %v65, 16
    %v95 = vor.u32 %v93, %v91
    %v97 = vshll.u32 %v66, 16
    %v99 = vrot.slane %v97, 1
    %v100 = vsel %vm72, %v95, %v99
    %v101 = vshrl.u32 %v66, 16
    %v103 = vor.u32 %v101, %v99
    %v106 = vunpack.c.l.b16 %v70
    %v107 = vunpack.c.l.b16 %v71
    %v108 = vpack.c.b16 %v107, %v106
    %vm109 = vcmask 80896
    %v111 = vsel %vm109, %v84, 0
    %v114 = vsel %vm109, %v92, 0
    %v117 = vsel %vm109, %v100, 0
    %v120 = vsel %vm109, %v103, 0
    %vm122 = vcmask 1044480
    %v124 = vsel %vm122, %v108, 0
    %126 = vmatpush.bf16.msra.mxu0 0
    %127 = vmatpush.bf16.msra.mxu0 0
    %128 = vmatpush.bf16.msra.mxu0 0
    %129 = vmatpush.bf16.msra.mxu0 0
    %130 = vmatpush.bf16.msra.mxu0 0
    %131 = vmatpush.bf16.msra.mxu0 0
    %132 = vmatpush.bf16.msra.mxu0 0
    %133 = vmatpush.bf16.msra.mxu0 %v124
    %134 = vmatmul.bf16.gmra.mxu0 %v111
    %v135 = vpop.f32.mrf.mxu0
    %v136 = vadd.f32 0.0, %v135
    %v137 = vpop.f32.mrf.mxu0
    %v138 = vadd.f32 0.0, %v137
    %139 = vmatmul.bf16.gmra.mxu0 %v114
    %v140 = vpop.f32.mrf.mxu0
    %v141 = vadd.f32 0.0, %v140
    %v142 = vpop.f32.mrf.mxu0
    %v143 = vadd.f32 0.0, %v142
    %144 = vmatmul.bf16.gmra.mxu0 %v117
    %v145 = vpop.f32.mrf.mxu0
    %v146 = vadd.f32 0.0, %v145
    %v147 = vpop.f32.mrf.mxu0
    %v148 = vadd.f32 0.0, %v147
    %149 = vmatmul.bf16.gmra.mxu0 %v120
    %v150 = vpop.f32.mrf.mxu0
    %v151 = vadd.f32 0.0, %v150
    %v152 = vpop.f32.mrf.mxu0
    %v153 = vadd.f32 0.0, %v152
    %154 = vdwg.mxu0
    %v157 = vunpack.c.l.b16 %v67
    %v158 = vunpack.c.l.b16 %v68
    %v159 = vpack.c.b16 %v158, %v157
    %v160 = vsel %vm109, %v63, 0
    %v162 = vsel %vm109, %v64, 0
    %v164 = vsel %vm109, %v65, 0
    %v166 = vsel %vm109, %v66, 0
    %v169 = vsel %vm122, %v159, 0
    %171 = vmatpush.bf16.msra.mxu0 0
    %172 = vmatpush.bf16.msra.mxu0 0
    %173 = vmatpush.bf16.msra.mxu0 0
    %174 = vmatpush.bf16.msra.mxu0 0
    %175 = vmatpush.bf16.msra.mxu0 0
    %176 = vmatpush.bf16.msra.mxu0 0
    %177 = vmatpush.bf16.msra.mxu0 0
    %178 = vmatpush.bf16.msra.mxu0 %v169
    %179 = vmatmul.bf16.gmra.mxu0 %v160
    %v180 = vpop.f32.mrf.mxu0
    %v181 = vadd.f32 %v136, %v180
    %v182 = vpop.f32.mrf.mxu0
    %v183 = vadd.f32 %v138, %v182
    %184 = vmatmul.bf16.gmra.mxu0 %v162
    %v185 = vpop.f32.mrf.mxu0
    %v186 = vadd.f32 %v141, %v185
    %v187 = vpop.f32.mrf.mxu0
    %v188 = vadd.f32 %v143, %v187
    %189 = vmatmul.bf16.gmra.mxu0 %v164
    %v190 = vpop.f32.mrf.mxu0
    %v191 = vadd.f32 %v146, %v190
    %v192 = vpop.f32.mrf.mxu0
    %v193 = vadd.f32 %v148, %v192
    %194 = vmatmul.bf16.gmra.mxu0 %v166
    %v195 = vpop.f32.mrf.mxu0
    %v196 = vadd.f32 %v151, %v195
    %v197 = vpop.f32.mrf.mxu0
    %v198 = vadd.f32 %v153, %v197
    %199 = vdwg.mxu0
    %s200 = scalar_lea.vmem %s1, 16
    %v201 = vld [vmem:[%s200] sm:$0xf]
    %v202 = vld [vmem:[%s200 + $0x4] sm:$0x1]
    %vm207 = vcmask 1046528
    %v208 = vrot.slane %v63, 1
    %v209 = vrot.slane %v64, 1
    %v210 = vsel %vm207, %v208, %v209
    %v211 = vrot.slane %v65, 1
    %v212 = vsel %vm207, %v209, %v211
    %v213 = vrot.slane %v66, 1
    %v214 = vsel %vm207, %v211, %v213
    %v217 = vunpack.c.l.b16 %v201
    %v218 = vunpack.c.l.b16 %v202
    %v219 = vpack.c.b16 %v218, %v217
    %v221 = vsel %vm109, %v210, 0
    %v224 = vsel %vm109, %v212, 0
    %v227 = vsel %vm109, %v214, 0
    %v230 = vsel %vm109, %v213, 0
    %v233 = vsel %vm122, %v219, 0
    %235 = vmatpush.bf16.msra.mxu0 0
    %236 = vmatpush.bf16.msra.mxu0 0
    %237 = vmatpush.bf16.msra.mxu0 0
    %238 = vmatpush.bf16.msra.mxu0 0
    %239 = vmatpush.bf16.msra.mxu0 0
    %240 = vmatpush.bf16.msra.mxu0 0
    %241 = vmatpush.bf16.msra.mxu0 0
    %242 = vmatpush.bf16.msra.mxu0 %v233
    %243 = vmatmul.bf16.gmra.mxu0 %v221
    %v244 = vpop.f32.mrf.mxu0
    %v245 = vadd.f32 0.0, %v244
    %v246 = vpop.f32.mrf.mxu0
    %v247 = vadd.f32 0.0, %v246
    %248 = vmatmul.bf16.gmra.mxu0 %v224
    %v249 = vpop.f32.mrf.mxu0
    %v250 = vadd.f32 0.0, %v249
    %v251 = vpop.f32.mrf.mxu0
    %v252 = vadd.f32 0.0, %v251
    %253 = vmatmul.bf16.gmra.mxu0 %v227
    %v254 = vpop.f32.mrf.mxu0
    %v255 = vadd.f32 0.0, %v254
    %v256 = vpop.f32.mrf.mxu0
    %v257 = vadd.f32 0.0, %v256
    %258 = vmatmul.bf16.gmra.mxu0 %v230
    %v259 = vpop.f32.mrf.mxu0
    %v260 = vadd.f32 0.0, %v259
    %v261 = vpop.f32.mrf.mxu0
    %v262 = vadd.f32 0.0, %v261
    %263 = vdwg.mxu0
    %v264 = vadd.f32 %v181, %v245
    %v265 = vadd.f32 %v183, %v247
    %v266 = vadd.f32 %v186, %v250
    %v267 = vadd.f32 %v188, %v252
    %v268 = vadd.f32 %v191, %v255
    %v269 = vadd.f32 %v193, %v257
    %v270 = vadd.f32 %v196, %v260
    %v271 = vadd.f32 %v198, %v262
    %v272 = vld [vmem:[%s2] sm:$0x1]
    %v274 = vperm.slane %v272, 0
    %v276 = vmul.f32 %v264, %v274
    %v277 = vmul.f32 %v265, %v274
    %v278 = vmul.f32 %v266, %v274
    %v279 = vmul.f32 %v267, %v274
    %v280 = vmul.f32 %v268, %v274
    %v281 = vmul.f32 %v269, %v274
    %v282 = vmul.f32 %v270, %v274
    %v283 = vmul.f32 %v271, %v274
    %v284 = vld [vmem:[%s3] sm:$0x1]
    %v286 = vperm.slane %v284, 0
    %v288 = vadd.f32 %v276, %v286
    %v289 = vadd.f32 %v277, %v286
    %v290 = vadd.f32 %v278, %v286
    %v291 = vadd.f32 %v279, %v286
    %v292 = vadd.f32 %v280, %v286
    %v293 = vadd.f32 %v281, %v286
    %v294 = vadd.f32 %v282, %v286
    %v295 = vadd.f32 %v283, %v286
    %v296 = vmax.f32 %v288, 0.0
    %v297 = vmax.f32 %v289, 0.0
    %v298 = vmax.f32 %v290, 0.0
    %v299 = vmax.f32 %v291, 0.0
    %v300 = vmax.f32 %v292, 0.0
    %v301 = vmax.f32 %v293, 0.0
    %v302 = vmax.f32 %v294, 0.0
    %v303 = vmax.f32 %v295, 0.0
    %vm312 = vcmask 1046528
    %v313 = vrot.slane %v296, 1
    %v314 = vrot.slane %v297, 1
    %v315 = vsel %vm312, %v313, %v314
    %v316 = vrot.slane %v298, 1
    %v317 = vsel %vm312, %v314, %v316
    %v318 = vrot.slane %v299, 1
    %v319 = vsel %vm312, %v316, %v318
    %v320 = vrot.slane %v300, 1
    %v321 = vsel %vm312, %v318, %v320
    %v322 = vrot.slane %v301, 1
    %v323 = vsel %vm312, %v320, %v322
    %v324 = vrot.slane %v302, 1
    %v325 = vsel %vm312, %v322, %v324
    %v326 = vrot.slane %v303, 1
    %v327 = vsel %vm312, %v324, %v326
    %v336 = vmax.f32 %v296, %v315
    %v337 = vmax.f32 %v297, %v317
    %v338 = vmax.f32 %v298, %v319
    %v339 = vmax.f32 %v299, %v321
    %v340 = vmax.f32 %v300, %v323
    %v341 = vmax.f32 %v301, %v325
    %v342 = vmax.f32 %v302, %v327
    %v343 = vmax.f32 %v303, %v326
    %v344 = vpack.c.bf16 %v337, %v336
    %v345 = vpack.c.bf16 %v339, %v338
    %v346 = vpack.c.bf16 %v341, %v340
    %v347 = vpack.c.bf16 %v343, %v342
    %v348 = vld [vmem:[%s4] sm:$0xf]
    %v349 = vld [vmem:[%s4 + $0x4] sm:$0xf]
    %v350 = vld [vmem:[%s4 + $0x8] sm:$0xf]
    %v351 = vld [vmem:[%s4 + $0xc] sm:$0xf]
    %v352 = vld [vmem:[%s4 + $0x10] sm:$0xf]
    %v353 = vld [vmem:[%s4 + $0x14] sm:$0xf]
    %v354 = vld [vmem:[%s4 + $0x18] sm:$0xf]
    %v355 = vld [vmem:[%s4 + $0x1c] sm:$0xf]
    %s356 = scalar_lea.vmem %s4, 32
    %v357 = vld [vmem:[%s356] sm:$0xf]
    %v358 = vld [vmem:[%s356 + $0x4] sm:$0xf]
    %v359 = vld [vmem:[%s356 + $0x8] sm:$0xf]
    %v360 = vld [vmem:[%s356 + $0xc] sm:$0xf]
    %v361 = vld [vmem:[%s356 + $0x10] sm:$0xf]
    %v362 = vld [vmem:[%s356 + $0x14] sm:$0xf]
    %v363 = vld [vmem:[%s356 + $0x18] sm:$0xf]
    %v364 = vld [vmem:[%s356 + $0x1c] sm:$0xf]
    %v366 = vshrl.u32 %v344, 16
    %v368 = vshll.u32 %v344, 16
    %v370 = vrot.slane %v368, 1
    %v371 = vor.u32 %v366, %v370
    %v373 = vshll.u32 %v345, 16
    %v375 = vrot.slane %v373, 1
    %v376 = vsel %vm72, %v371, %v375
    %v377 = vshrl.u32 %v345, 16
    %v379 = vor.u32 %v377, %v375
    %v381 = vshll.u32 %v346, 16
    %v383 = vrot.slane %v381, 1
    %v384 = vsel %vm72, %v379, %v383
    %v385 = vshrl.u32 %v346, 16
    %v387 = vor.u32 %v385, %v383
    %v389 = vshll.u32 %v347, 16
    %v391 = vrot.slane %v389, 1
    %v392 = vsel %vm72, %v387, %v391
    %v393 = vshrl.u32 %v347, 16
    %v395 = vor.u32 %v393, %v391
    %v404 = vunpack.c.l.b16 %v357
    %v405 = vunpack.c.l.b16 %v358
    %v406 = vunpack.c.l.b16 %v359
    %v407 = vunpack.c.l.b16 %v360
    %v408 = vunpack.c.l.b16 %v361
    %v409 = vunpack.c.l.b16 %v362
    %v410 = vunpack.c.l.b16 %v363
    %v411 = vunpack.c.l.b16 %v364
    %v412 = vpack.c.b16 %v405, %v404
    %v413 = vpack.c.b16 %v407, %v406
    %v414 = vpack.c.b16 %v409, %v408
    %v415 = vpack.c.b16 %v411, %v410
    %vm420 = vcmask 523264
    %v422 = vsel %vm420, %v376, 0
    %v425 = vsel %vm420, %v384, 0
    %v428 = vsel %vm420, %v392, 0
    %v431 = vsel %vm420, %v395, 0
    %433 = vmatpush.bf16.msra.mxu0 0
    %434 = vmatpush.bf16.msra.mxu0 0
    %435 = vmatpush.bf16.msra.mxu0 0
    %436 = vmatpush.bf16.msra.mxu0 0
    %437 = vmatpush.bf16.msra.mxu0 %v415
    %438 = vmatpush.bf16.msra.mxu0 %v414
    %439 = vmatpush.bf16.msra.mxu0 %v413
    %440 = vmatpush.bf16.msra.mxu0 %v412
    %441 = vmatmul.bf16.gmra.mxu0 %v422
    %v442 = vpop.f32.mrf.mxu0
    %v443 = vadd.f32 0.0, %v442
    %v444 = vpop.f32.mrf.mxu0
    %v445 = vadd.f32 0.0, %v444
    %446 = vmatmul.bf16.gmra.mxu0 %v425
    %v447 = vpop.f32.mrf.mxu0
    %v448 = vadd.f32 0.0, %v447
    %v449 = vpop.f32.mrf.mxu0
    %v450 = vadd.f32 0.0, %v449
    %451 = vmatmul.bf16.gmra.mxu0 %v428
    %v452 = vpop.f32.mrf.mxu0
    %v453 = vadd.f32 0.0, %v452
    %v454 = vpop.f32.mrf.mxu0
    %v455 = vadd.f32 0.0, %v454
    %456 = vmatmul.bf16.gmra.mxu0 %v431
    %v457 = vpop.f32.mrf.mxu0
    %v458 = vadd.f32 0.0, %v457
    %v459 = vpop.f32.mrf.mxu0
    %v460 = vadd.f32 0.0, %v459
    %461 = vdwg.mxu0
    %v470 = vunpack.c.l.b16 %v348
    %v471 = vunpack.c.l.b16 %v349
    %v472 = vunpack.c.l.b16 %v350
    %v473 = vunpack.c.l.b16 %v351
    %v474 = vunpack.c.l.b16 %v352
    %v475 = vunpack.c.l.b16 %v353
    %v476 = vunpack.c.l.b16 %v354
    %v477 = vunpack.c.l.b16 %v355
    %v478 = vpack.c.b16 %v471, %v470
    %v479 = vpack.c.b16 %v473, %v472
    %v480 = vpack.c.b16 %v475, %v474
    %v481 = vpack.c.b16 %v477, %v476
    %v486 = vsel %vm420, %v344, 0
    %v488 = vsel %vm420, %v345, 0
    %v490 = vsel %vm420, %v346, 0
    %v492 = vsel %vm420, %v347, 0
    %494 = vmatpush.bf16.msra.mxu0 0
    %495 = vmatpush.bf16.msra.mxu0 0
    %496 = vmatpush.bf16.msra.mxu0 0
    %497 = vmatpush.bf16.msra.mxu0 0
    %498 = vmatpush.bf16.msra.mxu0 %v481
    %499 = vmatpush.bf16.msra.mxu0 %v480
    %500 = vmatpush.bf16.msra.mxu0 %v479
    %501 = vmatpush.bf16.msra.mxu0 %v478
    %502 = vmatmul.bf16.gmra.mxu0 %v486
    %v503 = vpop.f32.mrf.mxu0
    %v504 = vadd.f32 %v443, %v503
    %v505 = vpop.f32.mrf.mxu0
    %v506 = vadd.f32 %v445, %v505
    %507 = vmatmul.bf16.gmra.mxu0 %v488
    %v508 = vpop.f32.mrf.mxu0
    %v509 = vadd.f32 %v448, %v508
    %v510 = vpop.f32.mrf.mxu0
    %v511 = vadd.f32 %v450, %v510
    %512 = vmatmul.bf16.gmra.mxu0 %v490
    %v513 = vpop.f32.mrf.mxu0
    %v514 = vadd.f32 %v453, %v513
    %v515 = vpop.f32.mrf.mxu0
    %v516 = vadd.f32 %v455, %v515
    %517 = vmatmul.bf16.gmra.mxu0 %v492
    %v518 = vpop.f32.mrf.mxu0
    %v519 = vadd.f32 %v458, %v518
    %v520 = vpop.f32.mrf.mxu0
    %v521 = vadd.f32 %v460, %v520
    %522 = vdwg.mxu0
    %s523 = scalar_lea.vmem %s4, 64
    %v524 = vld [vmem:[%s523] sm:$0xf]
    %v525 = vld [vmem:[%s523 + $0x4] sm:$0xf]
    %v526 = vld [vmem:[%s523 + $0x8] sm:$0xf]
    %v527 = vld [vmem:[%s523 + $0xc] sm:$0xf]
    %v528 = vld [vmem:[%s523 + $0x10] sm:$0xf]
    %v529 = vld [vmem:[%s523 + $0x14] sm:$0xf]
    %v530 = vld [vmem:[%s523 + $0x18] sm:$0xf]
    %v531 = vld [vmem:[%s523 + $0x1c] sm:$0xf]
    %v536 = vrot.slane %v344, 1
    %v537 = vrot.slane %v345, 1
    %v538 = vsel %vm207, %v536, %v537
    %v539 = vrot.slane %v346, 1
    %v540 = vsel %vm207, %v537, %v539
    %v541 = vrot.slane %v347, 1
    %v542 = vsel %vm207, %v539, %v541
    %v551 = vunpack.c.l.b16 %v524
    %v552 = vunpack.c.l.b16 %v525
    %v553 = vunpack.c.l.b16 %v526
    %v554 = vunpack.c.l.b16 %v527
    %v555 = vunpack.c.l.b16 %v528
    %v556 = vunpack.c.l.b16 %v529
    %v557 = vunpack.c.l.b16 %v530
    %v558 = vunpack.c.l.b16 %v531
    %v559 = vpack.c.b16 %v552, %v551
    %v560 = vpack.c.b16 %v554, %v553
    %v561 = vpack.c.b16 %v556, %v555
    %v562 = vpack.c.b16 %v558, %v557
    %v568 = vsel %vm420, %v538, 0
    %v571 = vsel %vm420, %v540, 0
    %v574 = vsel %vm420, %v542, 0
    %v577 = vsel %vm420, %v541, 0
    %579 = vmatpush.bf16.msra.mxu0 0
    %580 = vmatpush.bf16.msra.mxu0 0
    %581 = vmatpush.bf16.msra.mxu0 0
    %582 = vmatpush.bf16.msra.mxu0 0
    %583 = vmatpush.bf16.msra.mxu0 %v562
    %584 = vmatpush.bf16.msra.mxu0 %v561
    %585 = vmatpush.bf16.msra.mxu0 %v560
    %586 = vmatpush.bf16.msra.mxu0 %v559
    %587 = vmatmul.bf16.gmra.mxu0 %v568
    %v588 = vpop.f32.mrf.mxu0
    %v589 = vadd.f32 0.0, %v588
    %v590 = vpop.f32.mrf.mxu0
    %v591 = vadd.f32 0.0, %v590
    %592 = vmatmul.bf16.gmra.mxu0 %v571
    %v593 = vpop.f32.mrf.mxu0
    %v594 = vadd.f32 0.0, %v593
    %v595 = vpop.f32.mrf.mxu0
    %v596 = vadd.f32 0.0, %v595
    %597 = vmatmul.bf16.gmra.mxu0 %v574
    %v598 = vpop.f32.mrf.mxu0
    %v599 = vadd.f32 0.0, %v598
    %v600 = vpop.f32.mrf.mxu0
    %v601 = vadd.f32 0.0, %v600
    %602 = vmatmul.bf16.gmra.mxu0 %v577
    %v603 = vpop.f32.mrf.mxu0
    %v604 = vadd.f32 0.0, %v603
    %v605 = vpop.f32.mrf.mxu0
    %v606 = vadd.f32 0.0, %v605
    %607 = vdwg.mxu0
    %v608 = vadd.f32 %v504, %v589
    %v609 = vadd.f32 %v506, %v591
    %v610 = vadd.f32 %v509, %v594
    %v611 = vadd.f32 %v511, %v596
    %v612 = vadd.f32 %v514, %v599
    %v613 = vadd.f32 %v516, %v601
    %v614 = vadd.f32 %v519, %v604
    %v615 = vadd.f32 %v521, %v606
    %v616 = vld [vmem:[%s5] sm:$0x1]
    %v618 = vperm.slane %v616, 0
    %v620 = vmul.f32 %v608, %v618
    %v621 = vmul.f32 %v609, %v618
    %v622 = vmul.f32 %v610, %v618
    %v623 = vmul.f32 %v611, %v618
    %v624 = vmul.f32 %v612, %v618
    %v625 = vmul.f32 %v613, %v618
    %v626 = vmul.f32 %v614, %v618
    %v627 = vmul.f32 %v615, %v618
    %v628 = vld [vmem:[%s6] sm:$0x1]
    %v630 = vperm.slane %v628, 0
    %v632 = vadd.f32 %v620, %v630
    %v633 = vadd.f32 %v621, %v630
    %v634 = vadd.f32 %v622, %v630
    %v635 = vadd.f32 %v623, %v630
    %v636 = vadd.f32 %v624, %v630
    %v637 = vadd.f32 %v625, %v630
    %v638 = vadd.f32 %v626, %v630
    %v639 = vadd.f32 %v627, %v630
    %v640 = vmax.f32 %v632, 0.0
    %v641 = vmax.f32 %v633, 0.0
    %v642 = vmax.f32 %v634, 0.0
    %v643 = vmax.f32 %v635, 0.0
    %v644 = vmax.f32 %v636, 0.0
    %v645 = vmax.f32 %v637, 0.0
    %v646 = vmax.f32 %v638, 0.0
    %v647 = vmax.f32 %v639, 0.0
    %v656 = vrot.slane %v640, 1
    %v657 = vrot.slane %v641, 1
    %v658 = vsel %vm312, %v656, %v657
    %v659 = vrot.slane %v642, 1
    %v660 = vsel %vm312, %v657, %v659
    %v661 = vrot.slane %v643, 1
    %v662 = vsel %vm312, %v659, %v661
    %v663 = vrot.slane %v644, 1
    %v664 = vsel %vm312, %v661, %v663
    %v665 = vrot.slane %v645, 1
    %v666 = vsel %vm312, %v663, %v665
    %v667 = vrot.slane %v646, 1
    %v668 = vsel %vm312, %v665, %v667
    %v669 = vrot.slane %v647, 1
    %v670 = vsel %vm312, %v667, %v669
    %v679 = vmax.f32 %v640, %v658
    %v680 = vmax.f32 %v641, %v660
    %v681 = vmax.f32 %v642, %v662
    %v682 = vmax.f32 %v643, %v664
    %v683 = vmax.f32 %v644, %v666
    %v684 = vmax.f32 %v645, %v668
    %v685 = vmax.f32 %v646, %v670
    %v686 = vmax.f32 %v647, %v669
    %v687 = vpack.c.bf16 %v680, %v679
    %v688 = vpack.c.bf16 %v682, %v681
    %v689 = vpack.c.bf16 %v684, %v683
    %v690 = vpack.c.bf16 %v685, %v685
    %v691 = vld [vmem:[%s7] sm:$0xff]
    %v692 = vld [vmem:[%s7 + $0x8] sm:$0xff]
    %v693 = vld [vmem:[%s7 + $0x10] sm:$0xff]
    %v694 = vld [vmem:[%s7 + $0x18] sm:$0xff]
    %v695 = vld [vmem:[%s7 + $0x20] sm:$0xff]
    %v696 = vld [vmem:[%s7 + $0x28] sm:$0xff]
    %v697 = vld [vmem:[%s7 + $0x30] sm:$0xff]
    %v698 = vld [vmem:[%s7 + $0x38] sm:$0xff]
    %v699 = vld [vmem:[%s7 + $0x40] sm:$0xff]
    %v700 = vld [vmem:[%s7 + $0x48] sm:$0xff]
    %v701 = vld [vmem:[%s7 + $0x50] sm:$0xff]
    %v702 = vld [vmem:[%s7 + $0x58] sm:$0xff]
    %v703 = vld [vmem:[%s7 + $0x60] sm:$0xff]
    %v704 = vld [vmem:[%s7 + $0x68] sm:$0xff]
    %v705 = vld [vmem:[%s7 + $0x70] sm:$0xff]
    %v706 = vld [vmem:[%s7 + $0x78] sm:$0xff]
    %v707 = vpack.c.bf16 %v686, %v685
    %s708 = scalar_lea.vmem %s7, 128
    %v709 = vld [vmem:[%s708] sm:$0xff]
    %v710 = vld [vmem:[%s708 + $0x8] sm:$0xff]
    %v711 = vld [vmem:[%s708 + $0x10] sm:$0xff]
    %v712 = vld [vmem:[%s708 + $0x18] sm:$0xff]
    %v713 = vld [vmem:[%s708 + $0x20] sm:$0xff]
    %v714 = vld [vmem:[%s708 + $0x28] sm:$0xff]
    %v715 = vld [vmem:[%s708 + $0x30] sm:$0xff]
    %v716 = vld [vmem:[%s708 + $0x38] sm:$0xff]
    %v717 = vld [vmem:[%s708 + $0x40] sm:$0xff]
    %v718 = vld [vmem:[%s708 + $0x48] sm:$0xff]
    %v719 = vld [vmem:[%s708 + $0x50] sm:$0xff]
    %v720 = vld [vmem:[%s708 + $0x58] sm:$0xff]
    %v721 = vld [vmem:[%s708 + $0x60] sm:$0xff]
    %v722 = vld [vmem:[%s708 + $0x68] sm:$0xff]
    %v723 = vld [vmem:[%s708 + $0x70] sm:$0xff]
    %v724 = vld [vmem:[%s708 + $0x78] sm:$0xff]
    %v726 = vshrl.u32 %v687, 16
    %v728 = vshll.u32 %v687, 16
    %v730 = vrot.slane %v728, 1
    %v731 = vor.u32 %v726, %v730
    %v733 = vshll.u32 %v688, 16
    %v735 = vrot.slane %v733, 1
    %v736 = vsel %vm72, %v731, %v735
    %v737 = vshrl.u32 %v688, 16
    %v739 = vor.u32 %v737, %v735
    %v741 = vshll.u32 %v689, 16
    %v743 = vrot.slane %v741, 1
    %v744 = vsel %vm72, %v739, %v743
    %v745 = vshrl.u32 %v689, 16
    %v747 = vor.u32 %v745, %v743
    %v749 = vshll.u32 %v707, 16
    %v751 = vrot.slane %v749, 1
    %v752 = vsel %vm72, %v747, %v751
    %v753 = vshrl.u32 %v707, 16
    %v755 = vor.u32 %v753, %v751
    %v776 = vunpack.c.l.b16 %v709
    %v777 = vunpack.c.h.b16 %v709
    %v778 = vunpack.c.l.b16 %v710
    %v779 = vunpack.c.h.b16 %v710
    %v780 = vunpack.c.l.b16 %v711
    %v781 = vunpack.c.h.b16 %v711
    %v782 = vunpack.c.l.b16 %v712
    %v783 = vunpack.c.h.b16 %v712
    %v784 = vunpack.c.l.b16 %v713
    %v785 = vunpack.c.h.b16 %v713
    %v786 = vunpack.c.l.b16 %v714
    %v787 = vunpack.c.h.b16 %v714
    %v788 = vunpack.c.l.b16 %v715
    %v789 = vunpack.c.h.b16 %v715
    %v790 = vunpack.c.l.b16 %v716
    %v791 = vunpack.c.h.b16 %v716
    %v792 = vunpack.c.l.b16 %v717
    %v793 = vunpack.c.h.b16 %v717
    %v794 = vunpack.c.l.b16 %v718
    %v795 = vunpack.c.h.b16 %v718
    %v796 = vunpack.c.l.b16 %v719
    %v797 = vunpack.c.h.b16 %v719
    %v798 = vunpack.c.l.b16 %v720
    %v799 = vunpack.c.h.b16 %v720
    %v800 = vunpack.c.l.b16 %v721
    %v801 = vunpack.c.h.b16 %v721
    %v802 = vunpack.c.l.b16 %v722
    %v803 = vunpack.c.h.b16 %v722
    %v804 = vunpack.c.l.b16 %v723
    %v805 = vunpack.c.h.b16 %v723
    %v806 = vunpack.c.l.b16 %v724
    %v807 = vunpack.c.h.b16 %v724
    %v808 = vpack.c.b16 %v778, %v776
    %v809 = vpack.c.b16 %v779, %v777
    %v810 = vpack.c.b16 %v782, %v780
    %v811 = vpack.c.b16 %v783, %v781
    %v812 = vpack.c.b16 %v786, %v784
    %v813 = vpack.c.b16 %v787, %v785
    %v814 = vpack.c.b16 %v790, %v788
    %v815 = vpack.c.b16 %v791, %v789
    %v816 = vpack.c.b16 %v794, %v792
    %v817 = vpack.c.b16 %v795, %v793
    %v818 = vpack.c.b16 %v798, %v796
    %v819 = vpack.c.b16 %v799, %v797
    %v820 = vpack.c.b16 %v802, %v800
    %v821 = vpack.c.b16 %v803, %v801
    %v822 = vpack.c.b16 %v806, %v804
    %v823 = vpack.c.b16 %v807, %v805
    %840 = vmatpush.bf16.msra.mxu0 %v822
    %841 = vmatpush.bf16.msra.mxu0 %v820
    %842 = vmatpush.bf16.msra.mxu0 %v818
    %843 = vmatpush.bf16.msra.mxu0 %v816
    %844 = vmatpush.bf16.msra.mxu0 %v814
    %845 = vmatpush.bf16.msra.mxu0 %v812
    %846 = vmatpush.bf16.msra.mxu0 %v810
    %847 = vmatpush.bf16.msra.mxu0 %v808
    %848 = vmatmul.bf16.gmra.mxu0 %v736
    %v849 = vpop.f32.mrf.mxu0
    %v850 = vadd.f32 0.0, %v849
    %v851 = vpop.f32.mrf.mxu0
    %v852 = vadd.f32 0.0, %v851
    %853 = vmatmul.bf16.gmra.mxu0 %v744
    %v854 = vpop.f32.mrf.mxu0
    %v855 = vadd.f32 0.0, %v854
    %v856 = vpop.f32.mrf.mxu0
    %v857 = vadd.f32 0.0, %v856
    %858 = vmatmul.bf16.gmra.mxu0 %v752
    %v859 = vpop.f32.mrf.mxu0
    %v860 = vadd.f32 0.0, %v859
    %v861 = vpop.f32.mrf.mxu0
    %v862 = vadd.f32 0.0, %v861
    %863 = vmatmul.bf16.gmra.mxu0 %v755
    %v864 = vpop.f32.mrf.mxu0
    %v865 = vadd.f32 0.0, %v864
    %v866 = vpop.f32.mrf.mxu0
    %867 = vdwg.mxu0
    %868 = vmatpush.bf16.msra.mxu0 %v823
    %869 = vmatpush.bf16.msra.mxu0 %v821
    %870 = vmatpush.bf16.msra.mxu0 %v819
    %871 = vmatpush.bf16.msra.mxu0 %v817
    %872 = vmatpush.bf16.msra.mxu0 %v815
    %873 = vmatpush.bf16.msra.mxu0 %v813
    %874 = vmatpush.bf16.msra.mxu0 %v811
    %875 = vmatpush.bf16.msra.mxu0 %v809
    %876 = vmatmul.bf16.gmra.mxu0 %v736
    %v877 = vpop.f32.mrf.mxu0
    %v878 = vadd.f32 0.0, %v877
    %v879 = vpop.f32.mrf.mxu0
    %v880 = vadd.f32 0.0, %v879
    %881 = vmatmul.bf16.gmra.mxu0 %v744
    %v882 = vpop.f32.mrf.mxu0
    %v883 = vadd.f32 0.0, %v882
    %v884 = vpop.f32.mrf.mxu0
    %v885 = vadd.f32 0.0, %v884
    %886 = vmatmul.bf16.gmra.mxu0 %v752
    %v887 = vpop.f32.mrf.mxu0
    %v888 = vadd.f32 0.0, %v887
    %v889 = vpop.f32.mrf.mxu0
    %v890 = vadd.f32 0.0, %v889
    %891 = vmatmul.bf16.gmra.mxu0 %v755
    %v892 = vpop.f32.mrf.mxu0
    %v893 = vadd.f32 0.0, %v892
    %v894 = vpop.f32.mrf.mxu0
    %895 = vdwg.mxu0
    %v912 = vunpack.c.l.b16 %v691
    %v913 = vunpack.c.h.b16 %v691
    %v914 = vunpack.c.l.b16 %v692
    %v915 = vunpack.c.h.b16 %v692
    %v916 = vunpack.c.l.b16 %v693
    %v917 = vunpack.c.h.b16 %v693
    %v918 = vunpack.c.l.b16 %v694
    %v919 = vunpack.c.h.b16 %v694
    %v920 = vunpack.c.l.b16 %v695
    %v921 = vunpack.c.h.b16 %v695
    %v922 = vunpack.c.l.b16 %v696
    %v923 = vunpack.c.h.b16 %v696
    %v924 = vunpack.c.l.b16 %v697
    %v925 = vunpack.c.h.b16 %v697
    %v926 = vunpack.c.l.b16 %v698
    %v927 = vunpack.c.h.b16 %v698
    %v928 = vunpack.c.l.b16 %v699
    %v929 = vunpack.c.h.b16 %v699
    %v930 = vunpack.c.l.b16 %v700
    %v931 = vunpack.c.h.b16 %v700
    %v932 = vunpack.c.l.b16 %v701
    %v933 = vunpack.c.h.b16 %v701
    %v934 = vunpack.c.l.b16 %v702
    %v935 = vunpack.c.h.b16 %v702
    %v936 = vunpack.c.l.b16 %v703
    %v937 = vunpack.c.h.b16 %v703
    %v938 = vunpack.c.l.b16 %v704
    %v939 = vunpack.c.h.b16 %v704
    %v940 = vunpack.c.l.b16 %v705
    %v941 = vunpack.c.h.b16 %v705
    %v942 = vunpack.c.l.b16 %v706
    %v943 = vunpack.c.h.b16 %v706
    %v944 = vpack.c.b16 %v914, %v912
    %v945 = vpack.c.b16 %v915, %v913
    %v946 = vpack.c.b16 %v918, %v916
    %v947 = vpack.c.b16 %v919, %v917
    %v948 = vpack.c.b16 %v922, %v920
    %v949 = vpack.c.b16 %v923, %v921
    %v950 = vpack.c.b16 %v926, %v924
    %v951 = vpack.c.b16 %v927, %v925
    %v952 = vpack.c.b16 %v930, %v928
    %v953 = vpack.c.b16 %v931, %v929
    %v954 = vpack.c.b16 %v934, %v932
    %v955 = vpack.c.b16 %v935, %v933
    %v956 = vpack.c.b16 %v938, %v936
    %v957 = vpack.c.b16 %v939, %v937
    %v958 = vpack.c.b16 %v942, %v940
    %v959 = vpack.c.b16 %v943, %v941
    %976 = vmatpush.bf16.msra.mxu0 %v958
    %977 = vmatpush.bf16.msra.mxu0 %v956
    %978 = vmatpush.bf16.msra.mxu0 %v954
    %979 = vmatpush.bf16.msra.mxu0 %v952
    %980 = vmatpush.bf16.msra.mxu0 %v950
    %981 = vmatpush.bf16.msra.mxu0 %v948
    %982 = vmatpush.bf16.msra.mxu0 %v946
    %983 = vmatpush.bf16.msra.mxu0 %v944
    %984 = vmatmul.bf16.gmra.mxu0 %v687
    %v985 = vpop.f32.mrf.mxu0
    %v986 = vadd.f32 %v850, %v985
    %v987 = vpop.f32.mrf.mxu0
    %v988 = vadd.f32 %v852, %v987
    %989 = vmatmul.bf16.gmra.mxu0 %v688
    %v990 = vpop.f32.mrf.mxu0
    %v991 = vadd.f32 %v855, %v990
    %v992 = vpop.f32.mrf.mxu0
    %v993 = vadd.f32 %v857, %v992
    %994 = vmatmul.bf16.gmra.mxu0 %v689
    %v995 = vpop.f32.mrf.mxu0
    %v996 = vadd.f32 %v860, %v995
    %v997 = vpop.f32.mrf.mxu0
    %v998 = vadd.f32 %v862, %v997
    %999 = vmatmul.bf16.gmra.mxu0 %v690
    %v1000 = vpop.f32.mrf.mxu0
    %v1001 = vadd.f32 %v865, %v1000
    %v1002 = vpop.f32.mrf.mxu0
    %1003 = vdwg.mxu0
    %1004 = vmatpush.bf16.msra.mxu0 %v959
    %1005 = vmatpush.bf16.msra.mxu0 %v957
    %1006 = vmatpush.bf16.msra.mxu0 %v955
    %1007 = vmatpush.bf16.msra.mxu0 %v953
    %1008 = vmatpush.bf16.msra.mxu0 %v951
    %1009 = vmatpush.bf16.msra.mxu0 %v949
    %1010 = vmatpush.bf16.msra.mxu0 %v947
    %1011 = vmatpush.bf16.msra.mxu0 %v945
    %1012 = vmatmul.bf16.gmra.mxu0 %v687
    %v1013 = vpop.f32.mrf.mxu0
    %v1014 = vadd.f32 %v878, %v1013
    %v1015 = vpop.f32.mrf.mxu0
    %v1016 = vadd.f32 %v880, %v1015
    %1017 = vmatmul.bf16.gmra.mxu0 %v688
    %v1018 = vpop.f32.mrf.mxu0
    %v1019 = vadd.f32 %v883, %v1018
    %v1020 = vpop.f32.mrf.mxu0
    %v1021 = vadd.f32 %v885, %v1020
    %1022 = vmatmul.bf16.gmra.mxu0 %v689
    %v1023 = vpop.f32.mrf.mxu0
    %v1024 = vadd.f32 %v888, %v1023
    %v1025 = vpop.f32.mrf.mxu0
    %v1026 = vadd.f32 %v890, %v1025
    %1027 = vmatmul.bf16.gmra.mxu0 %v690
    %v1028 = vpop.f32.mrf.mxu0
    %v1029 = vadd.f32 %v893, %v1028
    %v1030 = vpop.f32.mrf.mxu0
    %1031 = vdwg.mxu0
    %s1032 = scalar_lea.vmem %s7, 256
    %v1033 = vld [vmem:[%s1032] sm:$0xff]
    %v1034 = vld [vmem:[%s1032 + $0x8] sm:$0xff]
    %v1035 = vld [vmem:[%s1032 + $0x10] sm:$0xff]
    %v1036 = vld [vmem:[%s1032 + $0x18] sm:$0xff]
    %v1037 = vld [vmem:[%s1032 + $0x20] sm:$0xff]
    %v1038 = vld [vmem:[%s1032 + $0x28] sm:$0xff]
    %v1039 = vld [vmem:[%s1032 + $0x30] sm:$0xff]
    %v1040 = vld [vmem:[%s1032 + $0x38] sm:$0xff]
    %v1041 = vld [vmem:[%s1032 + $0x40] sm:$0xff]
    %v1042 = vld [vmem:[%s1032 + $0x48] sm:$0xff]
    %v1043 = vld [vmem:[%s1032 + $0x50] sm:$0xff]
    %v1044 = vld [vmem:[%s1032 + $0x58] sm:$0xff]
    %v1045 = vld [vmem:[%s1032 + $0x60] sm:$0xff]
    %v1046 = vld [vmem:[%s1032 + $0x68] sm:$0xff]
    %v1047 = vld [vmem:[%s1032 + $0x70] sm:$0xff]
    %v1048 = vld [vmem:[%s1032 + $0x78] sm:$0xff]
    %v1053 = vrot.slane %v687, 1
    %v1054 = vrot.slane %v688, 1
    %v1055 = vsel %vm207, %v1053, %v1054
    %v1056 = vrot.slane %v689, 1
    %v1057 = vsel %vm207, %v1054, %v1056
    %v1058 = vrot.slane %v707, 1
    %v1059 = vsel %vm207, %v1056, %v1058
    %v1080 = vunpack.c.l.b16 %v1033
    %v1081 = vunpack.c.h.b16 %v1033
    %v1082 = vunpack.c.l.b16 %v1034
    %v1083 = vunpack.c.h.b16 %v1034
    %v1084 = vunpack.c.l.b16 %v1035
    %v1085 = vunpack.c.h.b16 %v1035
    %v1086 = vunpack.c.l.b16 %v1036
    %v1087 = vunpack.c.h.b16 %v1036
    %v1088 = vunpack.c.l.b16 %v1037
    %v1089 = vunpack.c.h.b16 %v1037
    %v1090 = vunpack.c.l.b16 %v1038
    %v1091 = vunpack.c.h.b16 %v1038
    %v1092 = vunpack.c.l.b16 %v1039
    %v1093 = vunpack.c.h.b16 %v1039
    %v1094 = vunpack.c.l.b16 %v1040
    %v1095 = vunpack.c.h.b16 %v1040
    %v1096 = vunpack.c.l.b16 %v1041
    %v1097 = vunpack.c.h.b16 %v1041
    %v1098 = vunpack.c.l.b16 %v1042
    %v1099 = vunpack.c.h.b16 %v1042
    %v1100 = vunpack.c.l.b16 %v1043
    %v1101 = vunpack.c.h.b16 %v1043
    %v1102 = vunpack.c.l.b16 %v1044
    %v1103 = vunpack.c.h.b16 %v1044
    %v1104 = vunpack.c.l.b16 %v1045
    %v1105 = vunpack.c.h.b16 %v1045
    %v1106 = vunpack.c.l.b16 %v1046
    %v1107 = vunpack.c.h.b16 %v1046
    %v1108 = vunpack.c.l.b16 %v1047
    %v1109 = vunpack.c.h.b16 %v1047
    %v1110 = vunpack.c.l.b16 %v1048
    %v1111 = vunpack.c.h.b16 %v1048
    %v1112 = vpack.c.b16 %v1082, %v1080
    %v1113 = vpack.c.b16 %v1083, %v1081
    %v1114 = vpack.c.b16 %v1086, %v1084
    %v1115 = vpack.c.b16 %v1087, %v1085
    %v1116 = vpack.c.b16 %v1090, %v1088
    %v1117 = vpack.c.b16 %v1091, %v1089
    %v1118 = vpack.c.b16 %v1094, %v1092
    %v1119 = vpack.c.b16 %v1095, %v1093
    %v1120 = vpack.c.b16 %v1098, %v1096
    %v1121 = vpack.c.b16 %v1099, %v1097
    %v1122 = vpack.c.b16 %v1102, %v1100
    %v1123 = vpack.c.b16 %v1103, %v1101
    %v1124 = vpack.c.b16 %v1106, %v1104
    %v1125 = vpack.c.b16 %v1107, %v1105
    %v1126 = vpack.c.b16 %v1110, %v1108
    %v1127 = vpack.c.b16 %v1111, %v1109
    %1144 = vmatpush.bf16.msra.mxu0 %v1126
    %1145 = vmatpush.bf16.msra.mxu0 %v1124
    %1146 = vmatpush.bf16.msra.mxu0 %v1122
    %1147 = vmatpush.bf16.msra.mxu0 %v1120
    %1148 = vmatpush.bf16.msra.mxu0 %v1118
    %1149 = vmatpush.bf16.msra.mxu0 %v1116
    %1150 = vmatpush.bf16.msra.mxu0 %v1114
    %1151 = vmatpush.bf16.msra.mxu0 %v1112
    %1152 = vmatmul.bf16.gmra.mxu0 %v1055
    %v1153 = vpop.f32.mrf.mxu0
    %v1154 = vadd.f32 0.0, %v1153
    %v1155 = vpop.f32.mrf.mxu0
    %v1156 = vadd.f32 0.0, %v1155
    %1157 = vmatmul.bf16.gmra.mxu0 %v1057
    %v1158 = vpop.f32.mrf.mxu0
    %v1159 = vadd.f32 0.0, %v1158
    %v1160 = vpop.f32.mrf.mxu0
    %v1161 = vadd.f32 0.0, %v1160
    %1162 = vmatmul.bf16.gmra.mxu0 %v1059
    %v1163 = vpop.f32.mrf.mxu0
    %v1164 = vadd.f32 0.0, %v1163
    %v1165 = vpop.f32.mrf.mxu0
    %v1166 = vadd.f32 0.0, %v1165
    %1167 = vmatmul.bf16.gmra.mxu0 %v1058
    %v1168 = vpop.f32.mrf.mxu0
    %v1169 = vadd.f32 0.0, %v1168
    %v1170 = vpop.f32.mrf.mxu0
    %1171 = vdwg.mxu0
    %1172 = vmatpush.bf16.msra.mxu0 %v1127
    %1173 = vmatpush.bf16.msra.mxu0 %v1125
    %1174 = vmatpush.bf16.msra.mxu0 %v1123
    %1175 = vmatpush.bf16.msra.mxu0 %v1121
    %1176 = vmatpush.bf16.msra.mxu0 %v1119
    %1177 = vmatpush.bf16.msra.mxu0 %v1117
    %1178 = vmatpush.bf16.msra.mxu0 %v1115
    %1179 = vmatpush.bf16.msra.mxu0 %v1113
    %1180 = vmatmul.bf16.gmra.mxu0 %v1055
    %v1181 = vpop.f32.mrf.mxu0
    %v1182 = vadd.f32 0.0, %v1181
    %v1183 = vpop.f32.mrf.mxu0
    %v1184 = vadd.f32 0.0, %v1183
    %1185 = vmatmul.bf16.gmra.mxu0 %v1057
    %v1186 = vpop.f32.mrf.mxu0
    %v1187 = vadd.f32 0.0, %v1186
    %v1188 = vpop.f32.mrf.mxu0
    %v1189 = vadd.f32 0.0, %v1188
    %1190 = vmatmul.bf16.gmra.mxu0 %v1059
    %v1191 = vpop.f32.mrf.mxu0
    %v1192 = vadd.f32 0.0, %v1191
    %v1193 = vpop.f32.mrf.mxu0
    %v1194 = vadd.f32 0.0, %v1193
    %1195 = vmatmul.bf16.gmra.mxu0 %v1058
    %v1196 = vpop.f32.mrf.mxu0
    %v1197 = vadd.f32 0.0, %v1196
    %v1198 = vpop.f32.mrf.mxu0
    %1199 = vdwg.mxu0
    %v1200 = vadd.f32 %v986, %v1154
    %v1201 = vadd.f32 %v1014, %v1182
    %v1202 = vadd.f32 %v988, %v1156
    %v1203 = vadd.f32 %v1016, %v1184
    %v1204 = vadd.f32 %v991, %v1159
    %v1205 = vadd.f32 %v1019, %v1187
    %v1206 = vadd.f32 %v993, %v1161
    %v1207 = vadd.f32 %v1021, %v1189
    %v1208 = vadd.f32 %v996, %v1164
    %v1209 = vadd.f32 %v1024, %v1192
    %v1210 = vadd.f32 %v998, %v1166
    %v1211 = vadd.f32 %v1026, %v1194
    %v1212 = vadd.f32 %v1001, %v1169
    %v1213 = vadd.f32 %v1029, %v1197
    %v1214 = vld [vmem:[%s8] sm:$0x3]
    %v1216 = vperm.slane %v1214, 0
    %v1217 = vperm.slane %v1214, 1
    %v1220 = vmul.f32 %v1200, %v1216
    %v1221 = vmul.f32 %v1201, %v1217
    %v1222 = vmul.f32 %v1202, %v1216
    %v1223 = vmul.f32 %v1203, %v1217
    %v1224 = vmul.f32 %v1204, %v1216
    %v1225 = vmul.f32 %v1205, %v1217
    %v1226 = vmul.f32 %v1206, %v1216
    %v1227 = vmul.f32 %v1207, %v1217
    %v1228 = vmul.f32 %v1208, %v1216
    %v1229 = vmul.f32 %v1209, %v1217
    %v1230 = vmul.f32 %v1210, %v1216
    %v1231 = vmul.f32 %v1211, %v1217
    %v1232 = vmul.f32 %v1212, %v1216
    %v1233 = vmul.f32 %v1213, %v1217
    %v1234 = vld [vmem:[%s9] sm:$0x3]
    %v1236 = vperm.slane %v1234, 0
    %v1237 = vperm.slane %v1234, 1
    %v1240 = vadd.f32 %v1220, %v1236
    %v1241 = vadd.f32 %v1221, %v1237
    %v1242 = vadd.f32 %v1222, %v1236
    %v1243 = vadd.f32 %v1223, %v1237
    %v1244 = vadd.f32 %v1224, %v1236
    %v1245 = vadd.f32 %v1225, %v1237
    %v1246 = vadd.f32 %v1226, %v1236
    %v1247 = vadd.f32 %v1227, %v1237
    %v1248 = vadd.f32 %v1228, %v1236
    %v1249 = vadd.f32 %v1229, %v1237
    %v1250 = vadd.f32 %v1230, %v1236
    %v1251 = vadd.f32 %v1231, %v1237
    %v1252 = vadd.f32 %v1232, %v1236
    %v1253 = vadd.f32 %v1233, %v1237
    %v1254 = vmax.f32 %v1240, 0.0
    %v1255 = vmax.f32 %v1241, 0.0
    %v1256 = vmax.f32 %v1242, 0.0
    %v1257 = vmax.f32 %v1243, 0.0
    %v1258 = vmax.f32 %v1244, 0.0
    %v1259 = vmax.f32 %v1245, 0.0
    %v1260 = vmax.f32 %v1246, 0.0
    %v1261 = vmax.f32 %v1247, 0.0
    %v1262 = vmax.f32 %v1248, 0.0
    %v1263 = vmax.f32 %v1249, 0.0
    %v1264 = vmax.f32 %v1250, 0.0
    %v1265 = vmax.f32 %v1251, 0.0
    %v1266 = vmax.f32 %v1252, 0.0
    %v1267 = vmax.f32 %v1253, 0.0
    %v1282 = vrot.slane %v1254, 1
    %v1283 = vrot.slane %v1256, 1
    %v1284 = vsel %vm312, %v1282, %v1283
    %v1285 = vrot.slane %v1255, 1
    %v1286 = vrot.slane %v1257, 1
    %v1287 = vsel %vm312, %v1285, %v1286
    %v1288 = vrot.slane %v1258, 1
    %v1289 = vsel %vm312, %v1283, %v1288
    %v1290 = vrot.slane %v1259, 1
    %v1291 = vsel %vm312, %v1286, %v1290
    %v1292 = vrot.slane %v1260, 1
    %v1293 = vsel %vm312, %v1288, %v1292
    %v1294 = vrot.slane %v1261, 1
    %v1295 = vsel %vm312, %v1290, %v1294
    %v1296 = vrot.slane %v1262, 1
    %v1297 = vsel %vm312, %v1292, %v1296
    %v1298 = vrot.slane %v1263, 1
    %v1299 = vsel %vm312, %v1294, %v1298
    %v1300 = vrot.slane %v1264, 1
    %v1301 = vsel %vm312, %v1296, %v1300
    %v1302 = vrot.slane %v1265, 1
    %v1303 = vsel %vm312, %v1298, %v1302
    %v1304 = vrot.slane %v1266, 1
    %v1305 = vsel %vm312, %v1300, %v1304
    %v1306 = vrot.slane %v1267, 1
    %v1307 = vsel %vm312, %v1302, %v1306
    %v1322 = vmax.f32 %v1254, %v1284
    %v1323 = vmax.f32 %v1255, %v1287
    %v1324 = vmax.f32 %v1256, %v1289
    %v1325 = vmax.f32 %v1257, %v1291
    %v1326 = vmax.f32 %v1258, %v1293
    %v1327 = vmax.f32 %v1259, %v1295
    %v1328 = vmax.f32 %v1260, %v1297
    %v1329 = vmax.f32 %v1261, %v1299
    %v1330 = vmax.f32 %v1262, %v1301
    %v1331 = vmax.f32 %v1263, %v1303
    %v1332 = vmax.f32 %v1264, %v1305
    %v1333 = vmax.f32 %v1265, %v1307
    %v1334 = vmax.f32 %v1266, %v1304
    %v1335 = vmax.f32 %v1267, %v1306
    %v1336 = vpack.c.bf16 %v1324, %v1322
    %v1337 = vpack.c.bf16 %v1325, %v1323
    %v1338 = vpack.c.bf16 %v1328, %v1326
    %v1339 = vpack.c.bf16 %v1329, %v1327
    %v1340 = vpack.c.bf16 %v1332, %v1330
    %v1341 = vpack.c.bf16 %v1333, %v1331
    %v1342 = vpack.c.bf16 %v1334, %v1334
    %v1343 = vpack.c.bf16 %v1335, %v1335
    %v1344 = vld [vmem:[%s10] sm:$0xf]
    %v1345 = vld [vmem:[%s10 + $0x4] sm:$0xf]
    %v1346 = vld [vmem:[%s10 + $0x8] sm:$0xf]
    %v1347 = vld [vmem:[%s10 + $0xc] sm:$0xf]
    %v1348 = vld [vmem:[%s10 + $0x10] sm:$0xf]
    %v1349 = vld [vmem:[%s10 + $0x14] sm:$0xf]
    %v1350 = vld [vmem:[%s10 + $0x18] sm:$0xf]
    %v1351 = vld [vmem:[%s10 + $0x1c] sm:$0xf]
    %v1352 = vld [vmem:[%s10 + $0x20] sm:$0xf]
    %v1353 = vld [vmem:[%s10 + $0x24] sm:$0xf]
    %v1354 = vld [vmem:[%s10 + $0x28] sm:$0xf]
    %v1355 = vld [vmem:[%s10 + $0x2c] sm:$0xf]
    %v1356 = vld [vmem:[%s10 + $0x30] sm:$0xf]
    %v1357 = vld [vmem:[%s10 + $0x34] sm:$0xf]
    %v1358 = vld [vmem:[%s10 + $0x38] sm:$0xf]
    %v1359 = vld [vmem:[%s10 + $0x3c] sm:$0xf]
    %v1360 = vld [vmem:[%s10 + $0x40] sm:$0xf]
    %v1361 = vld [vmem:[%s10 + $0x44] sm:$0xf]
    %v1362 = vld [vmem:[%s10 + $0x48] sm:$0xf]
    %v1363 = vld [vmem:[%s10 + $0x4c] sm:$0xf]
    %v1364 = vld [vmem:[%s10 + $0x50] sm:$0xf]
    %v1365 = vld [vmem:[%s10 + $0x54] sm:$0xf]
    %v1366 = vld [vmem:[%s10 + $0x58] sm:$0xf]
    %v1367 = vld [vmem:[%s10 + $0x5c] sm:$0xf]
    %v1368 = vld [vmem:[%s10 + $0x60] sm:$0xf]
    %v1369 = vld [vmem:[%s10 + $0x64] sm:$0xf]
    %v1370 = vld [vmem:[%s10 + $0x68] sm:$0xf]
    %v1371 = vld [vmem:[%s10 + $0x6c] sm:$0xf]
    %v1372 = vld [vmem:[%s10 + $0x70] sm:$0xf]
    %v1373 = vld [vmem:[%s10 + $0x74] sm:$0xf]
    %v1374 = vld [vmem:[%s10 + $0x78] sm:$0xf]
    %v1375 = vld [vmem:[%s10 + $0x7c] sm:$0xf]
    %s1376 = scalar_lea.vmem %s10, 128
    %v1377 = vld [vmem:[%s1376] sm:$0xf]
    %v1378 = vld [vmem:[%s1376 + $0x4] sm:$0xf]
    %v1379 = vld [vmem:[%s1376 + $0x8] sm:$0xf]
    %v1380 = vld [vmem:[%s1376 + $0xc] sm:$0xf]
    %v1381 = vld [vmem:[%s1376 + $0x10] sm:$0xf]
    %v1382 = vld [vmem:[%s1376 + $0x14] sm:$0xf]
    %v1383 = vld [vmem:[%s1376 + $0x18] sm:$0xf]
    %v1384 = vld [vmem:[%s1376 + $0x1c] sm:$0xf]
    %v1385 = vld [vmem:[%s1376 + $0x20] sm:$0xf]
    %v1386 = vld [vmem:[%s1376 + $0x24] sm:$0xf]
    %v1387 = vld [vmem:[%s1376 + $0x28] sm:$0xf]
    %v1388 = vld [vmem:[%s1376 + $0x2c] sm:$0xf]
    %v1389 = vld [vmem:[%s1376 + $0x30] sm:$0xf]
    %v1390 = vld [vmem:[%s1376 + $0x34] sm:$0xf]
    %v1391 = vld [vmem:[%s1376 + $0x38] sm:$0xf]
    %v1392 = vld [vmem:[%s1376 + $0x3c] sm:$0xf]
    %v1393 = vld [vmem:[%s1376 + $0x40] sm:$0xf]
    %v1394 = vld [vmem:[%s1376 + $0x44] sm:$0xf]
    %v1395 = vld [vmem:[%s1376 + $0x48] sm:$0xf]
    %v1396 = vld [vmem:[%s1376 + $0x4c] sm:$0xf]
    %v1397 = vld [vmem:[%s1376 + $0x50] sm:$0xf]
    %v1398 = vld [vmem:[%s1376 + $0x54] sm:$0xf]
    %v1399 = vld [vmem:[%s1376 + $0x58] sm:$0xf]
    %v1400 = vld [vmem:[%s1376 + $0x5c] sm:$0xf]
    %v1401 = vld [vmem:[%s1376 + $0x60] sm:$0xf]
    %v1402 = vld [vmem:[%s1376 + $0x64] sm:$0xf]
    %v1403 = vld [vmem:[%s1376 + $0x68] sm:$0xf]
    %v1404 = vld [vmem:[%s1376 + $0x6c] sm:$0xf]
    %v1405 = vld [vmem:[%s1376 + $0x70] sm:$0xf]
    %v1406 = vld [vmem:[%s1376 + $0x74] sm:$0xf]
    %v1407 = vld [vmem:[%s1376 + $0x78] sm:$0xf]
    %v1408 = vld [vmem:[%s1376 + $0x7c] sm:$0xf]
    %v1410 = vshrl.u32 %v1336, 16
    %v1412 = vshll.u32 %v1336, 16
    %v1414 = vrot.slane %v1412, 1
    %v1415 = vor.u32 %v1410, %v1414
    %v1417 = vshll.u32 %v1338, 16
    %v1419 = vrot.slane %v1417, 1
    %v1420 = vsel %vm72, %v1415, %v1419
    %v1422 = vshrl.u32 %v1337, 16
    %v1424 = vshll.u32 %v1337, 16
    %v1426 = vrot.slane %v1424, 1
    %v1427 = vor.u32 %v1422, %v1426
    %v1429 = vshll.u32 %v1339, 16
    %v1431 = vrot.slane %v1429, 1
    %v1432 = vsel %vm72, %v1427, %v1431
    %v1433 = vshrl.u32 %v1338, 16
    %v1435 = vor.u32 %v1433, %v1419
    %v1437 = vshll.u32 %v1340, 16
    %v1439 = vrot.slane %v1437, 1
    %v1440 = vsel %vm72, %v1435, %v1439
    %v1441 = vshrl.u32 %v1339, 16
    %v1443 = vor.u32 %v1441, %v1431
    %v1445 = vshll.u32 %v1341, 16
    %v1447 = vrot.slane %v1445, 1
    %v1448 = vsel %vm72, %v1443, %v1447
    %v1449 = vshrl.u32 %v1340, 16
    %v1451 = vor.u32 %v1449, %v1439
    %v1453 = vshll.u32 %v1342, 16
    %v1455 = vrot.slane %v1453, 1
    %v1456 = vsel %vm72, %v1451, %v1455
    %v1457 = vshrl.u32 %v1341, 16
    %v1459 = vor.u32 %v1457, %v1447
    %v1461 = vshll.u32 %v1343, 16
    %v1463 = vrot.slane %v1461, 1
    %v1464 = vsel %vm72, %v1459, %v1463
    %v1465 = vshrl.u32 %v1342, 16
    %v1467 = vor.u32 %v1465, %v1455
    %v1468 = vshrl.u32 %v1343, 16
    %v1470 = vor.u32 %v1468, %v1463
    %v1511 = vunpack.c.l.b16 %v1377
    %v1512 = vunpack.c.l.b16 %v1378
    %v1513 = vunpack.c.l.b16 %v1379
    %v1514 = vunpack.c.l.b16 %v1380
    %v1515 = vunpack.c.l.b16 %v1381
    %v1516 = vunpack.c.l.b16 %v1382
    %v1517 = vunpack.c.l.b16 %v1383
    %v1518 = vunpack.c.l.b16 %v1384
    %v1519 = vunpack.c.l.b16 %v1385
    %v1520 = vunpack.c.l.b16 %v1386
    %v1521 = vunpack.c.l.b16 %v1387
    %v1522 = vunpack.c.l.b16 %v1388
    %v1523 = vunpack.c.l.b16 %v1389
    %v1524 = vunpack.c.l.b16 %v1390
    %v1525 = vunpack.c.l.b16 %v1391
    %v1526 = vunpack.c.l.b16 %v1392
    %v1527 = vunpack.c.l.b16 %v1393
    %v1528 = vunpack.c.l.b16 %v1394
    %v1529 = vunpack.c.l.b16 %v1395
    %v1530 = vunpack.c.l.b16 %v1396
    %v1531 = vunpack.c.l.b16 %v1397
    %v1532 = vunpack.c.l.b16 %v1398
    %v1533 = vunpack.c.l.b16 %v1399
    %v1534 = vunpack.c.l.b16 %v1400
    %v1535 = vunpack.c.l.b16 %v1401
    %v1536 = vunpack.c.l.b16 %v1402
    %v1537 = vunpack.c.l.b16 %v1403
    %v1538 = vunpack.c.l.b16 %v1404
    %v1539 = vunpack.c.l.b16 %v1405
    %v1540 = vunpack.c.l.b16 %v1406
    %v1541 = vunpack.c.l.b16 %v1407
    %v1542 = vunpack.c.l.b16 %v1408
    %v1543 = vpack.c.b16 %v1512, %v1511
    %v1544 = vpack.c.b16 %v1514, %v1513
    %v1545 = vpack.c.b16 %v1516, %v1515
    %v1546 = vpack.c.b16 %v1518, %v1517
    %v1547 = vpack.c.b16 %v1520, %v1519
    %v1548 = vpack.c.b16 %v1522, %v1521
    %v1549 = vpack.c.b16 %v1524, %v1523
    %v1550 = vpack.c.b16 %v1526, %v1525
    %v1551 = vpack.c.b16 %v1528, %v1527
    %v1552 = vpack.c.b16 %v1530, %v1529
    %v1553 = vpack.c.b16 %v1532, %v1531
    %v1554 = vpack.c.b16 %v1534, %v1533
    %v1555 = vpack.c.b16 %v1536, %v1535
    %v1556 = vpack.c.b16 %v1538, %v1537
    %v1557 = vpack.c.b16 %v1540, %v1539
    %v1558 = vpack.c.b16 %v1542, %v1541
    %1575 = vmatpush.bf16.msra.mxu0 %v1550
    %1576 = vmatpush.bf16.msra.mxu0 %v1549
    %1577 = vmatpush.bf16.msra.mxu0 %v1548
    %1578 = vmatpush.bf16.msra.mxu0 %v1547
    %1579 = vmatpush.bf16.msra.mxu0 %v1546
    %1580 = vmatpush.bf16.msra.mxu0 %v1545
    %1581 = vmatpush.bf16.msra.mxu0 %v1544
    %1582 = vmatpush.bf16.msra.mxu0 %v1543
    %1583 = vmatmul.bf16.gmra.mxu0 %v1420
    %v1584 = vpop.f32.mrf.mxu0
    %v1585 = vadd.f32 0.0, %v1584
    %v1586 = vpop.f32.mrf.mxu0
    %v1587 = vadd.f32 0.0, %v1586
    %1588 = vmatmul.bf16.gmra.mxu0 %v1440
    %v1589 = vpop.f32.mrf.mxu0
    %v1590 = vadd.f32 0.0, %v1589
    %v1591 = vpop.f32.mrf.mxu0
    %v1592 = vadd.f32 0.0, %v1591
    %1593 = vmatmul.bf16.gmra.mxu0 %v1456
    %v1594 = vpop.f32.mrf.mxu0
    %v1595 = vadd.f32 0.0, %v1594
    %v1596 = vpop.f32.mrf.mxu0
    %v1597 = vadd.f32 0.0, %v1596
    %1598 = vmatmul.bf16.gmra.mxu0 %v1467
    %v1599 = vpop.f32.mrf.mxu0
    %v1600 = vadd.f32 0.0, %v1599
    %v1601 = vpop.f32.mrf.mxu0
    %1602 = vdwg.mxu0
    %1603 = vmatpush.bf16.msra.mxu0 %v1558
    %1604 = vmatpush.bf16.msra.mxu0 %v1557
    %1605 = vmatpush.bf16.msra.mxu0 %v1556
    %1606 = vmatpush.bf16.msra.mxu0 %v1555
    %1607 = vmatpush.bf16.msra.mxu0 %v1554
    %1608 = vmatpush.bf16.msra.mxu0 %v1553
    %1609 = vmatpush.bf16.msra.mxu0 %v1552
    %1610 = vmatpush.bf16.msra.mxu0 %v1551
    %1611 = vmatmul.bf16.gmra.mxu0 %v1432
    %v1612 = vpop.f32.mrf.mxu0
    %v1613 = vadd.f32 %v1585, %v1612
    %v1614 = vpop.f32.mrf.mxu0
    %v1615 = vadd.f32 %v1587, %v1614
    %1616 = vmatmul.bf16.gmra.mxu0 %v1448
    %v1617 = vpop.f32.mrf.mxu0
    %v1618 = vadd.f32 %v1590, %v1617
    %v1619 = vpop.f32.mrf.mxu0
    %v1620 = vadd.f32 %v1592, %v1619
    %1621 = vmatmul.bf16.gmra.mxu0 %v1464
    %v1622 = vpop.f32.mrf.mxu0
    %v1623 = vadd.f32 %v1595, %v1622
    %v1624 = vpop.f32.mrf.mxu0
    %v1625 = vadd.f32 %v1597, %v1624
    %1626 = vmatmul.bf16.gmra.mxu0 %v1470
    %v1627 = vpop.f32.mrf.mxu0
    %v1628 = vadd.f32 %v1600, %v1627
    %v1629 = vpop.f32.mrf.mxu0
    %1630 = vdwg.mxu0
    %v1663 = vunpack.c.l.b16 %v1344
    %v1664 = vunpack.c.l.b16 %v1345
    %v1665 = vunpack.c.l.b16 %v1346
    %v1666 = vunpack.c.l.b16 %v1347
    %v1667 = vunpack.c.l.b16 %v1348
    %v1668 = vunpack.c.l.b16 %v1349
    %v1669 = vunpack.c.l.b16 %v1350
    %v1670 = vunpack.c.l.b16 %v1351
    %v1671 = vunpack.c.l.b16 %v1352
    %v1672 = vunpack.c.l.b16 %v1353
    %v1673 = vunpack.c.l.b16 %v1354
    %v1674 = vunpack.c.l.b16 %v1355
    %v1675 = vunpack.c.l.b16 %v1356
    %v1676 = vunpack.c.l.b16 %v1357
    %v1677 = vunpack.c.l.b16 %v1358
    %v1678 = vunpack.c.l.b16 %v1359
    %v1679 = vunpack.c.l.b16 %v1360
    %v1680 = vunpack.c.l.b16 %v1361
    %v1681 = vunpack.c.l.b16 %v1362
    %v1682 = vunpack.c.l.b16 %v1363
    %v1683 = vunpack.c.l.b16 %v1364
    %v1684 = vunpack.c.l.b16 %v1365
    %v1685 = vunpack.c.l.b16 %v1366
    %v1686 = vunpack.c.l.b16 %v1367
    %v1687 = vunpack.c.l.b16 %v1368
    %v1688 = vunpack.c.l.b16 %v1369
    %v1689 = vunpack.c.l.b16 %v1370
    %v1690 = vunpack.c.l.b16 %v1371
    %v1691 = vunpack.c.l.b16 %v1372
    %v1692 = vunpack.c.l.b16 %v1373
    %v1693 = vunpack.c.l.b16 %v1374
    %v1694 = vunpack.c.l.b16 %v1375
    %v1695 = vpack.c.b16 %v1664, %v1663
    %v1696 = vpack.c.b16 %v1666, %v1665
    %v1697 = vpack.c.b16 %v1668, %v1667
    %v1698 = vpack.c.b16 %v1670, %v1669
    %v1699 = vpack.c.b16 %v1672, %v1671
    %v1700 = vpack.c.b16 %v1674, %v1673
    %v1701 = vpack.c.b16 %v1676, %v1675
    %v1702 = vpack.c.b16 %v1678, %v1677
    %v1703 = vpack.c.b16 %v1680, %v1679
    %v1704 = vpack.c.b16 %v1682, %v1681
    %v1705 = vpack.c.b16 %v1684, %v1683
    %v1706 = vpack.c.b16 %v1686, %v1685
    %v1707 = vpack.c.b16 %v1688, %v1687
    %v1708 = vpack.c.b16 %v1690, %v1689
    %v1709 = vpack.c.b16 %v1692, %v1691
    %v1710 = vpack.c.b16 %v1694, %v1693
    %1727 = vmatpush.bf16.msra.mxu0 %v1702
    %1728 = vmatpush.bf16.msra.mxu0 %v1701
    %1729 = vmatpush.bf16.msra.mxu0 %v1700
    %1730 = vmatpush.bf16.msra.mxu0 %v1699
    %1731 = vmatpush.bf16.msra.mxu0 %v1698
    %1732 = vmatpush.bf16.msra.mxu0 %v1697
    %1733 = vmatpush.bf16.msra.mxu0 %v1696
    %1734 = vmatpush.bf16.msra.mxu0 %v1695
    %1735 = vmatmul.bf16.gmra.mxu0 %v1336
    %v1736 = vpop.f32.mrf.mxu0
    %v1737 = vadd.f32 %v1613, %v1736
    %v1738 = vpop.f32.mrf.mxu0
    %v1739 = vadd.f32 %v1615, %v1738
    %1740 = vmatmul.bf16.gmra.mxu0 %v1338
    %v1741 = vpop.f32.mrf.mxu0
    %v1742 = vadd.f32 %v1618, %v1741
    %v1743 = vpop.f32.mrf.mxu0
    %v1744 = vadd.f32 %v1620, %v1743
    %1745 = vmatmul.bf16.gmra.mxu0 %v1340
    %v1746 = vpop.f32.mrf.mxu0
    %v1747 = vadd.f32 %v1623, %v1746
    %v1748 = vpop.f32.mrf.mxu0
    %v1749 = vadd.f32 %v1625, %v1748
    %1750 = vmatmul.bf16.gmra.mxu0 %v1342
    %v1751 = vpop.f32.mrf.mxu0
    %v1752 = vadd.f32 %v1628, %v1751
    %v1753 = vpop.f32.mrf.mxu0
    %1754 = vdwg.mxu0
    %1755 = vmatpush.bf16.msra.mxu0 %v1710
    %1756 = vmatpush.bf16.msra.mxu0 %v1709
    %1757 = vmatpush.bf16.msra.mxu0 %v1708
    %1758 = vmatpush.bf16.msra.mxu0 %v1707
    %1759 = vmatpush.bf16.msra.mxu0 %v1706
    %1760 = vmatpush.bf16.msra.mxu0 %v1705
    %1761 = vmatpush.bf16.msra.mxu0 %v1704
    %1762 = vmatpush.bf16.msra.mxu0 %v1703
    %1763 = vmatmul.bf16.gmra.mxu0 %v1337
    %v1764 = vpop.f32.mrf.mxu0
    %v1765 = vadd.f32 %v1737, %v1764
    %v1766 = vpop.f32.mrf.mxu0
    %v1767 = vadd.f32 %v1739, %v1766
    %1768 = vmatmul.bf16.gmra.mxu0 %v1339
    %v1769 = vpop.f32.mrf.mxu0
    %v1770 = vadd.f32 %v1742, %v1769
    %v1771 = vpop.f32.mrf.mxu0
    %v1772 = vadd.f32 %v1744, %v1771
    %1773 = vmatmul.bf16.gmra.mxu0 %v1341
    %v1774 = vpop.f32.mrf.mxu0
    %v1775 = vadd.f32 %v1747, %v1774
    %v1776 = vpop.f32.mrf.mxu0
    %v1777 = vadd.f32 %v1749, %v1776
    %1778 = vmatmul.bf16.gmra.mxu0 %v1343
    %v1779 = vpop.f32.mrf.mxu0
    %v1780 = vadd.f32 %v1752, %v1779
    %v1781 = vpop.f32.mrf.mxu0
    %1782 = vdwg.mxu0
    %s1783 = scalar_lea.vmem %s10, 256
    %v1784 = vld [vmem:[%s1783] sm:$0xf]
    %v1785 = vld [vmem:[%s1783 + $0x4] sm:$0xf]
    %v1786 = vld [vmem:[%s1783 + $0x8] sm:$0xf]
    %v1787 = vld [vmem:[%s1783 + $0xc] sm:$0xf]
    %v1788 = vld [vmem:[%s1783 + $0x10] sm:$0xf]
    %v1789 = vld [vmem:[%s1783 + $0x14] sm:$0xf]
    %v1790 = vld [vmem:[%s1783 + $0x18] sm:$0xf]
    %v1791 = vld [vmem:[%s1783 + $0x1c] sm:$0xf]
    %v1792 = vld [vmem:[%s1783 + $0x20] sm:$0xf]
    %v1793 = vld [vmem:[%s1783 + $0x24] sm:$0xf]
    %v1794 = vld [vmem:[%s1783 + $0x28] sm:$0xf]
    %v1795 = vld [vmem:[%s1783 + $0x2c] sm:$0xf]
    %v1796 = vld [vmem:[%s1783 + $0x30] sm:$0xf]
    %v1797 = vld [vmem:[%s1783 + $0x34] sm:$0xf]
    %v1798 = vld [vmem:[%s1783 + $0x38] sm:$0xf]
    %v1799 = vld [vmem:[%s1783 + $0x3c] sm:$0xf]
    %v1800 = vld [vmem:[%s1783 + $0x40] sm:$0xf]
    %v1801 = vld [vmem:[%s1783 + $0x44] sm:$0xf]
    %v1802 = vld [vmem:[%s1783 + $0x48] sm:$0xf]
    %v1803 = vld [vmem:[%s1783 + $0x4c] sm:$0xf]
    %v1804 = vld [vmem:[%s1783 + $0x50] sm:$0xf]
    %v1805 = vld [vmem:[%s1783 + $0x54] sm:$0xf]
    %v1806 = vld [vmem:[%s1783 + $0x58] sm:$0xf]
    %v1807 = vld [vmem:[%s1783 + $0x5c] sm:$0xf]
    %v1808 = vld [vmem:[%s1783 + $0x60] sm:$0xf]
    %v1809 = vld [vmem:[%s1783 + $0x64] sm:$0xf]
    %v1810 = vld [vmem:[%s1783 + $0x68] sm:$0xf]
    %v1811 = vld [vmem:[%s1783 + $0x6c] sm:$0xf]
    %v1812 = vld [vmem:[%s1783 + $0x70] sm:$0xf]
    %v1813 = vld [vmem:[%s1783 + $0x74] sm:$0xf]
    %v1814 = vld [vmem:[%s1783 + $0x78] sm:$0xf]
    %v1815 = vld [vmem:[%s1783 + $0x7c] sm:$0xf]
    %v1824 = vrot.slane %v1336, 1
    %v1825 = vrot.slane %v1338, 1
    %v1826 = vsel %vm207, %v1824, %v1825
    %v1827 = vrot.slane %v1337, 1
    %v1828 = vrot.slane %v1339, 1
    %v1829 = vsel %vm207, %v1827, %v1828
    %v1830 = vrot.slane %v1340, 1
    %v1831 = vsel %vm207, %v1825, %v1830
    %v1832 = vrot.slane %v1341, 1
    %v1833 = vsel %vm207, %v1828, %v1832
    %v1834 = vrot.slane %v1342, 1
    %v1835 = vsel %vm207, %v1830, %v1834
    %v1836 = vrot.slane %v1343, 1
    %v1837 = vsel %vm207, %v1832, %v1836
    %v1878 = vunpack.c.l.b16 %v1784
    %v1879 = vunpack.c.l.b16 %v1785
    %v1880 = vunpack.c.l.b16 %v1786
    %v1881 = vunpack.c.l.b16 %v1787
    %v1882 = vunpack.c.l.b16 %v1788
    %v1883 = vunpack.c.l.b16 %v1789
    %v1884 = vunpack.c.l.b16 %v1790
    %v1885 = vunpack.c.l.b16 %v1791
    %v1886 = vunpack.c.l.b16 %v1792
    %v1887 = vunpack.c.l.b16 %v1793
    %v1888 = vunpack.c.l.b16 %v1794
    %v1889 = vunpack.c.l.b16 %v1795
    %v1890 = vunpack.c.l.b16 %v1796
    %v1891 = vunpack.c.l.b16 %v1797
    %v1892 = vunpack.c.l.b16 %v1798
    %v1893 = vunpack.c.l.b16 %v1799
    %v1894 = vunpack.c.l.b16 %v1800
    %v1895 = vunpack.c.l.b16 %v1801
    %v1896 = vunpack.c.l.b16 %v1802
    %v1897 = vunpack.c.l.b16 %v1803
    %v1898 = vunpack.c.l.b16 %v1804
    %v1899 = vunpack.c.l.b16 %v1805
    %v1900 = vunpack.c.l.b16 %v1806
    %v1901 = vunpack.c.l.b16 %v1807
    %v1902 = vunpack.c.l.b16 %v1808
    %v1903 = vunpack.c.l.b16 %v1809
    %v1904 = vunpack.c.l.b16 %v1810
    %v1905 = vunpack.c.l.b16 %v1811
    %v1906 = vunpack.c.l.b16 %v1812
    %v1907 = vunpack.c.l.b16 %v1813
    %v1908 = vunpack.c.l.b16 %v1814
    %v1909 = vunpack.c.l.b16 %v1815
    %v1910 = vpack.c.b16 %v1879, %v1878
    %v1911 = vpack.c.b16 %v1881, %v1880
    %v1912 = vpack.c.b16 %v1883, %v1882
    %v1913 = vpack.c.b16 %v1885, %v1884
    %v1914 = vpack.c.b16 %v1887, %v1886
    %v1915 = vpack.c.b16 %v1889, %v1888
    %v1916 = vpack.c.b16 %v1891, %v1890
    %v1917 = vpack.c.b16 %v1893, %v1892
    %v1918 = vpack.c.b16 %v1895, %v1894
    %v1919 = vpack.c.b16 %v1897, %v1896
    %v1920 = vpack.c.b16 %v1899, %v1898
    %v1921 = vpack.c.b16 %v1901, %v1900
    %v1922 = vpack.c.b16 %v1903, %v1902
    %v1923 = vpack.c.b16 %v1905, %v1904
    %v1924 = vpack.c.b16 %v1907, %v1906
    %v1925 = vpack.c.b16 %v1909, %v1908
    %1942 = vmatpush.bf16.msra.mxu0 %v1917
    %1943 = vmatpush.bf16.msra.mxu0 %v1916
    %1944 = vmatpush.bf16.msra.mxu0 %v1915
    %1945 = vmatpush.bf16.msra.mxu0 %v1914
    %1946 = vmatpush.bf16.msra.mxu0 %v1913
    %1947 = vmatpush.bf16.msra.mxu0 %v1912
    %1948 = vmatpush.bf16.msra.mxu0 %v1911
    %1949 = vmatpush.bf16.msra.mxu0 %v1910
    %1950 = vmatmul.bf16.gmra.mxu0 %v1826
    %v1951 = vpop.f32.mrf.mxu0
    %v1952 = vadd.f32 0.0, %v1951
    %v1953 = vpop.f32.mrf.mxu0
    %v1954 = vadd.f32 0.0, %v1953
    %1955 = vmatmul.bf16.gmra.mxu0 %v1831
    %v1956 = vpop.f32.mrf.mxu0
    %v1957 = vadd.f32 0.0, %v1956
    %v1958 = vpop.f32.mrf.mxu0
    %v1959 = vadd.f32 0.0, %v1958
    %1960 = vmatmul.bf16.gmra.mxu0 %v1835
    %v1961 = vpop.f32.mrf.mxu0
    %v1962 = vadd.f32 0.0, %v1961
    %v1963 = vpop.f32.mrf.mxu0
    %v1964 = vadd.f32 0.0, %v1963
    %1965 = vmatmul.bf16.gmra.mxu0 %v1834
    %v1966 = vpop.f32.mrf.mxu0
    %v1967 = vadd.f32 0.0, %v1966
    %v1968 = vpop.f32.mrf.mxu0
    %1969 = vdwg.mxu0
    %1970 = vmatpush.bf16.msra.mxu0 %v1925
    %1971 = vmatpush.bf16.msra.mxu0 %v1924
    %1972 = vmatpush.bf16.msra.mxu0 %v1923
    %1973 = vmatpush.bf16.msra.mxu0 %v1922
    %1974 = vmatpush.bf16.msra.mxu0 %v1921
    %1975 = vmatpush.bf16.msra.mxu0 %v1920
    %1976 = vmatpush.bf16.msra.mxu0 %v1919
    %1977 = vmatpush.bf16.msra.mxu0 %v1918
    %1978 = vmatmul.bf16.gmra.mxu0 %v1829
    %v1979 = vpop.f32.mrf.mxu0
    %v1980 = vadd.f32 %v1952, %v1979
    %v1981 = vpop.f32.mrf.mxu0
    %v1982 = vadd.f32 %v1954, %v1981
    %1983 = vmatmul.bf16.gmra.mxu0 %v1833
    %v1984 = vpop.f32.mrf.mxu0
    %v1985 = vadd.f32 %v1957, %v1984
    %v1986 = vpop.f32.mrf.mxu0
    %v1987 = vadd.f32 %v1959, %v1986
    %1988 = vmatmul.bf16.gmra.mxu0 %v1837
    %v1989 = vpop.f32.mrf.mxu0
    %v1990 = vadd.f32 %v1962, %v1989
    %v1991 = vpop.f32.mrf.mxu0
    %v1992 = vadd.f32 %v1964, %v1991
    %1993 = vmatmul.bf16.gmra.mxu0 %v1836
    %v1994 = vpop.f32.mrf.mxu0
    %v1995 = vadd.f32 %v1967, %v1994
    %v1996 = vpop.f32.mrf.mxu0
    %1997 = vdwg.mxu0
    %v1998 = vadd.f32 %v1765, %v1980
    %v1999 = vadd.f32 %v1767, %v1982
    %v2000 = vadd.f32 %v1770, %v1985
    %v2001 = vadd.f32 %v1772, %v1987
    %v2002 = vadd.f32 %v1775, %v1990
    %v2003 = vadd.f32 %v1777, %v1992
    %v2004 = vadd.f32 %v1780, %v1995
    %v2005 = vld [vmem:[%s11] sm:$0x1]
    %v2007 = vperm.slane %v2005, 0
    %v2009 = vmul.f32 %v1998, %v2007
    %v2010 = vmul.f32 %v1999, %v2007
    %v2011 = vmul.f32 %v2000, %v2007
    %v2012 = vmul.f32 %v2001, %v2007
    %v2013 = vmul.f32 %v2002, %v2007
    %v2014 = vmul.f32 %v2003, %v2007
    %v2015 = vmul.f32 %v2004, %v2007
    %v2016 = vld [vmem:[%s12] sm:$0x1]
    %v2018 = vperm.slane %v2016, 0
    %v2020 = vadd.f32 %v2009, %v2018
    %v2021 = vadd.f32 %v2010, %v2018
    %v2022 = vadd.f32 %v2011, %v2018
    %v2023 = vadd.f32 %v2012, %v2018
    %v2024 = vadd.f32 %v2013, %v2018
    %v2025 = vadd.f32 %v2014, %v2018
    %v2026 = vadd.f32 %v2015, %v2018
    %v2027 = vmax.f32 %v2020, 0.0
    %v2028 = vmax.f32 %v2021, 0.0
    %v2029 = vmax.f32 %v2022, 0.0
    %v2030 = vmax.f32 %v2023, 0.0
    %v2031 = vmax.f32 %v2024, 0.0
    %v2032 = vmax.f32 %v2025, 0.0
    %v2033 = vmax.f32 %v2026, 0.0
    %v2041 = vrot.slane %v2027, 1
    %v2042 = vrot.slane %v2028, 1
    %v2043 = vsel %vm312, %v2041, %v2042
    %v2044 = vrot.slane %v2029, 1
    %v2045 = vsel %vm312, %v2042, %v2044
    %v2046 = vrot.slane %v2030, 1
    %v2047 = vsel %vm312, %v2044, %v2046
    %v2048 = vrot.slane %v2031, 1
    %v2049 = vsel %vm312, %v2046, %v2048
    %v2050 = vrot.slane %v2032, 1
    %v2051 = vsel %vm312, %v2048, %v2050
    %v2052 = vrot.slane %v2033, 1
    %v2053 = vsel %vm312, %v2050, %v2052
    %v2061 = vmax.f32 %v2027, %v2043
    %v2062 = vmax.f32 %v2028, %v2045
    %v2063 = vmax.f32 %v2029, %v2047
    %v2064 = vmax.f32 %v2030, %v2049
    %v2065 = vmax.f32 %v2031, %v2051
    %v2066 = vmax.f32 %v2032, %v2053
    %v2067 = vmax.f32 %v2033, %v2052
    %v2068 = vld [vmem:[%s13] sm:$0x1]
    %v2069 = vpack.c.bf16 %v2062, %v2061
    %v2070 = vpack.c.bf16 %v2064, %v2063
    %v2071 = vpack.c.bf16 %v2066, %v2065
    %v2072 = vpack.c.bf16 %v2067, %v2067
    %vm2073 = vcmask 424960
    %v2075 = vsel %vm2073, %v2068, 0
    %vm2077 = vcmask 1041408
    %v2079 = vsel %vm2077, %v2072, 0
    %2081 = vmatpush.bf16.msra.mxu0 0
    %2082 = vmatpush.bf16.msra.mxu0 0
    %2083 = vmatpush.bf16.msra.mxu0 0
    %2084 = vmatpush.bf16.msra.mxu0 0
    %2085 = vmatpush.bf16.msra.mxu0 %v2079
    %2086 = vmatpush.bf16.msra.mxu0 %v2071
    %2087 = vmatpush.bf16.msra.mxu0 %v2070
    %2088 = vmatpush.bf16.msra.mxu0 %v2069
    %2089 = vmatmul.bf16.gmra.mxu0 %v2075
    %v2090 = vpop.f32.mrf.mxu0
    %v2091 = vadd.f32 0.0, %v2090
    %v2092 = vpop.f32.mrf.mxu0
    %2093 = vdwg.mxu0
    %v2094 = vpack.c.bf16 %v2091, %v2091
    %v2095 = vld [vmem:[%s14] sm:$0xf]
    %v2096 = vld [vmem:[%s14 + $0x4] sm:$0xf]
    %v2097 = vld [vmem:[%s14 + $0x8] sm:$0xf]
    %v2098 = vld [vmem:[%s14 + $0xc] sm:$0xf]
    %v2099 = vld [vmem:[%s14 + $0x10] sm:$0xf]
    %v2100 = vld [vmem:[%s14 + $0x14] sm:$0xf]
    %v2101 = vld [vmem:[%s14 + $0x18] sm:$0xf]
    %v2102 = vld [vmem:[%s14 + $0x1c] sm:$0xf]
    %v2103 = vld [vmem:[%s14 + $0x20] sm:$0xf]
    %v2104 = vld [vmem:[%s14 + $0x24] sm:$0xf]
    %v2105 = vld [vmem:[%s14 + $0x28] sm:$0xf]
    %v2106 = vld [vmem:[%s14 + $0x2c] sm:$0xf]
    %v2107 = vld [vmem:[%s14 + $0x30] sm:$0xf]
    %v2108 = vld [vmem:[%s14 + $0x34] sm:$0xf]
    %v2109 = vld [vmem:[%s14 + $0x38] sm:$0xf]
    %v2110 = vld [vmem:[%s14 + $0x3c] sm:$0xf]
    %v2111 = vld [vmem:[%s15] sm:$0x1]
    %v2113 = vperm.slane %v2111, 0
    %v2131 = vunpack.c.l.b16 %v2095
    %v2132 = vunpack.c.l.b16 %v2096
    %v2133 = vunpack.c.l.b16 %v2097
    %v2134 = vunpack.c.l.b16 %v2098
    %v2135 = vunpack.c.l.b16 %v2099
    %v2136 = vunpack.c.l.b16 %v2100
    %v2137 = vunpack.c.l.b16 %v2101
    %v2138 = vunpack.c.l.b16 %v2102
    %v2139 = vunpack.c.l.b16 %v2103
    %v2140 = vunpack.c.l.b16 %v2104
    %v2141 = vunpack.c.l.b16 %v2105
    %v2142 = vunpack.c.l.b16 %v2106
    %v2143 = vunpack.c.l.b16 %v2107
    %v2144 = vunpack.c.l.b16 %v2108
    %v2145 = vunpack.c.l.b16 %v2109
    %v2146 = vunpack.c.l.b16 %v2110
    %v2147 = vpack.c.b16 %v2132, %v2131
    %v2148 = vpack.c.b16 %v2134, %v2133
    %v2149 = vpack.c.b16 %v2136, %v2135
    %v2150 = vpack.c.b16 %v2138, %v2137
    %v2151 = vpack.c.b16 %v2140, %v2139
    %v2152 = vpack.c.b16 %v2142, %v2141
    %v2153 = vpack.c.b16 %v2144, %v2143
    %v2154 = vpack.c.b16 %v2146, %v2145
    %2163 = vmatpush.bf16.msra.mxu0 %v2154
    %2164 = vmatpush.bf16.msra.mxu0 %v2153
    %2165 = vmatpush.bf16.msra.mxu0 %v2152
    %2166 = vmatpush.bf16.msra.mxu0 %v2151
    %2167 = vmatpush.bf16.msra.mxu0 %v2150
    %2168 = vmatpush.bf16.msra.mxu0 %v2149
    %2169 = vmatpush.bf16.msra.mxu0 %v2148
    %2170 = vmatpush.bf16.msra.mxu0 %v2147
    %2171 = vmatmul.bf16.gmra.mxu0 %v2094
    %v2172 = vpop.f32.mrf.mxu0
    %v2173 = vadd.f32 %v2113, %v2172
    %v2174 = vpop.f32.mrf.mxu0
    %2175 = vdwg.mxu0
    %2176 = vst [vmem:[#allocation2] sm:$0x3] %v2173
    // Predicated region
    $region66: #{audio_cnn_pool_forward.1} parent=1 // pred_check
      _
    $region67: #{audio_cnn_pool_forward.1} parent=1 // pred_check_branch
      %2178 = sbr.rel (0) target = $region69
    $region68: #{audio_cnn_pool_forward.1} parent=1 // pred_region
      %2180 = vsyncadd [#allocation3], 0
      %s2182 = sshll.u32 [#allocation2], 4
      %s2183 = int_to_ptr.vmem [resolvable:$true] %s2182
      %s2184 = sshll.u32 %s16, 4
      %s2185 = int_to_ptr.hbm [resolvable:$true] %s2184
      %2187 = dma.vmem_to_hbm [thread:$0]  %s2183, 32, %s2185, [#allocation3]
    $region69: #{audio_cnn_pool_forward.1} parent=1 // pred_fallthru
      _
    // Predicated region
    $region70: #{audio_cnn_pool_forward.1} parent=1 // pred_check
      _
    $region71: #{audio_cnn_pool_forward.1} parent=1 // pred_check_branch
      %2189 = sbr.rel (0) target = $region73
    $region72: #{audio_cnn_pool_forward.1} parent=1 // pred_region
      %2191 = dma.done [#allocation3], 32
    $region73: #{audio_cnn_pool_forward.1} parent=1 // pred_fallthru
      _
    %2192 = vsyncpa [#allocation3], 1

</llo_original>
